<compile_context>
chip_gen: v5e
topology: v5e:2x2
jax: 0.10.0
libtpu: 0.0.40
codegen_flags: <defaults>
</compile_context>

<pallas_src>
import functools

import jax
import jax.numpy as jnp
from jax.experimental import pallas as pl
from jax.experimental.pallas import tpu as pltpu


# ------------------------------ helpers ------------------------------------

def _gelu_tanh(x):
    # TODO(synk): reference nn.GELU defaults to the exact erf form; the tanh
    # approximation is used here (EUP-friendly), numerics differ slightly.
    c = 0.7978845608028654  # sqrt(2/pi)
    return 0.5 * x * (1.0 + jnp.tanh(c * (x + 0.044715 * x * x * x)))


def _rmsnorm_f32(x, w):
    # TODO(synk): masked RMSNorm (norm_mask=keyframes) semantics of the
    # reference TransformerBlock are unspecified; standard per-token RMSNorm.
    ms = jnp.mean(x * x, axis=-1, keepdims=True)
    return x * jax.lax.rsqrt(ms + 1e-6) * w


# ----------------------------- Pallas kernel --------------------------------

def _encoder_kernel(x_ref, pad_ref, wemb_ref, bemb_ref,
                    n1_ref, wqkv_ref, bqkv_ref, wo_ref, bo_ref,
                    n2_ref, w1_ref, b1_ref, w2_ref, b2_ref, rel_ref,
                    o_ref, *, n_heads, scale):
    """One (batch element, layer) step.  o_ref is the VMEM-resident hidden
    state carried across the layer axis (its block index only depends on b)."""
    layer = pl.program_id(1)

    # Layer 0: input embedding  h = x @ We + be  (bf16 MXU, f32 acc).
    @pl.when(layer == 0)
    def _():
        e = jnp.dot(x_ref[...].astype(jnp.bfloat16), wemb_ref[...],
                    preferred_element_type=jnp.float32)
        o_ref[...] = e + bemb_ref[...].astype(jnp.float32)

    h = o_ref[...]                                            # (T, D) f32
    T, D = h.shape
    dh = D // n_heads

    # --- attention sublayer: RMSNorm -> fused QKV -> per-head attn -> proj --
    a = _rmsnorm_f32(h, n1_ref[...].astype(jnp.float32))      # (T, D)
    qkv = jnp.dot(a.astype(jnp.bfloat16), wqkv_ref[...],
                  preferred_element_type=jnp.float32)
    qkv = qkv + bqkv_ref[...].astype(jnp.float32)             # (T, 3D)
    q, k, v = qkv[:, :D], qkv[:, D:2 * D], qkv[:, 2 * D:]

    pad = pad_ref[...].astype(jnp.float32)                    # (1, T) key mask

    head_outs = []
    for hd in range(n_heads):
        qh = q[:, hd * dh:(hd + 1) * dh]
        kh = k[:, hd * dh:(hd + 1) * dh]
        vh = v[:, hd * dh:(hd + 1) * dh]
        # scores: contract the dh axis directly (no explicit transpose)
        s = jax.lax.dot_general(qh, kh, (((1,), (1,)), ((), ())),
                                preferred_element_type=jnp.float32) * scale
        s = s + rel_ref[hd].astype(jnp.float32) + pad         # rel-PE + padding
        m = jnp.max(s, axis=-1, keepdims=True)
        p = jnp.exp(s - m)
        p = p * pl.reciprocal(jnp.sum(p, axis=-1, keepdims=True), approx=True)
        head_outs.append(jnp.dot(p.astype(jnp.bfloat16),
                                 vh.astype(jnp.bfloat16),
                                 preferred_element_type=jnp.float32))
    attn = jnp.concatenate(head_outs, axis=-1)                # (T, D)

    proj = jnp.dot(attn.astype(jnp.bfloat16), wo_ref[...],
                   preferred_element_type=jnp.float32)
    h = h + proj + bo_ref[...].astype(jnp.float32)            # residual

    # --- FFN sublayer: RMSNorm -> W1 + GELU -> W2 -> residual ---------------
    f = _rmsnorm_f32(h, n2_ref[...].astype(jnp.float32))
    u = jnp.dot(f.astype(jnp.bfloat16), w1_ref[...],
                preferred_element_type=jnp.float32)
    u = _gelu_tanh(u + b1_ref[...].astype(jnp.float32))       # f32 GELU
    y = jnp.dot(u.astype(jnp.bfloat16), w2_ref[...],
                preferred_element_type=jnp.float32)
    y = y + b2_ref[...].astype(jnp.float32)

    o_ref[...] = h + y                                        # carried to l+1


# --------------------------- model (glue in JAX) ----------------------------

def init_params(key, d_model, d_pose, n_layers, n_heads, max_len):
    """Per-layer params stacked along a leading layer axis (for streaming)."""
    d_ff = 4 * d_model
    ks = jax.random.split(key, 6)

    def dense(k, shape):
        # MXU weights stored in bf16 (f32 accumulation happens in-kernel).
        w = 0.02 * jax.random.normal(k, shape, jnp.float32)
        return w.astype(jnp.bfloat16)

    L = n_layers
    return {
        "wemb": dense(ks[0], (d_pose, d_model)),
        "bemb": jnp.zeros((1, d_model), jnp.float32),
        "norm1": jnp.ones((L, 1, d_model), jnp.float32),
        "norm2": jnp.ones((L, 1, d_model), jnp.float32),
        "wqkv": dense(ks[1], (L, d_model, 3 * d_model)),
        "bqkv": jnp.zeros((L, 1, 3 * d_model), jnp.float32),
        "wo": dense(ks[2], (L, d_model, d_model)),
        "bo": jnp.zeros((L, 1, d_model), jnp.float32),
        "w1": dense(ks[3], (L, d_model, d_ff)),
        "b1": jnp.zeros((L, 1, d_ff), jnp.float32),
        "w2": dense(ks[4], (L, d_ff, d_model)),
        "b2": jnp.zeros((L, 1, d_model), jnp.float32),
        # learned relative-position bias table, (L, H, 2*max_len-1)
        "rel_bias": 0.02 * jax.random.normal(
            ks[5], (L, n_heads, 2 * max_len - 1), jnp.float32),
    }


def _rel_bias_matrices(table, T):
    # table: (L, H, 2*max_len-1) -> (L, H, T, T); bias[.,.,i,j]=table[., i-j+L-1]
    max_len = (table.shape[-1] + 1) // 2
    idx = jnp.arange(T)[:, None] - jnp.arange(T)[None, :] + (max_len - 1)
    return table[:, :, idx]          # batch-independent, tiny vs (B, H, T, T)


def citl_encoder(params, x, keyframes):
    """x: (B, T, d_pose) f32, keyframes: (B, T) int -> (B, T, d_model) f32."""
    B, T, d_pose = x.shape
    D = params["wemb"].shape[1]
    L, H = params["rel_bias"].shape[0], params["rel_bias"].shape[1]
    dff = params["w1"].shape[2]
    dh = D // H

    # key-padding additive mask (emb_mask = keyframes == 0), shape (B, 1, T)
    pad = jnp.where(keyframes == 0, -1e9, 0.0).astype(jnp.float32)[:, None, :]
    rel = _rel_bias_matrices(params["rel_bias"], T)            # (L, H, T, T)

    kern = functools.partial(_encoder_kernel, n_heads=H,
                             scale=1.0 / (dh ** 0.5))

    # (PyTorch transposes to (T, B, D) and back; pure layout change, folded.)
    return pl.pallas_call(
        kern,
        grid=(B, L),
        in_specs=[
            pl.BlockSpec((None, T, d_pose), lambda b, l: (b, 0, 0)),     # x
            pl.BlockSpec((None, 1, T),      lambda b, l: (b, 0, 0)),     # pad
            pl.BlockSpec((d_pose, D),       lambda b, l: (0, 0)),        # wemb
            pl.BlockSpec((1, D),            lambda b, l: (0, 0)),        # bemb
            pl.BlockSpec((None, 1, D),      lambda b, l: (l, 0, 0)),     # norm1
            pl.BlockSpec((None, D, 3 * D),  lambda b, l: (l, 0, 0)),     # wqkv
            pl.BlockSpec((None, 1, 3 * D),  lambda b, l: (l, 0, 0)),     # bqkv
            pl.BlockSpec((None, D, D),      lambda b, l: (l, 0, 0)),     # wo
            pl.BlockSpec((None, 1, D),      lambda b, l: (l, 0, 0)),     # bo
            pl.BlockSpec((None, 1, D),      lambda b, l: (l, 0, 0)),     # norm2
            pl.BlockSpec((None, D, dff),    lambda b, l: (l, 0, 0)),     # w1
            pl.BlockSpec((None, 1, dff),    lambda b, l: (l, 0, 0)),     # b1
            pl.BlockSpec((None, dff, D),    lambda b, l: (l, 0, 0)),     # w2
            pl.BlockSpec((None, 1, D),      lambda b, l: (l, 0, 0)),     # b2
            pl.BlockSpec((None, H, T, T),   lambda b, l: (l, 0, 0, 0)),  # rel
        ],
        out_specs=pl.BlockSpec((None, T, D), lambda b, l: (b, 0, 0)),
        out_shape=jax.ShapeDtypeStruct((B, T, D), jnp.float32),
        # TODO(synk): for large T / d_model, switch to a flash-style KV grid
        # axis and set vmem_limit_bytes explicitly (v7x has 64 MiB VMEM).
        compiler_params=pltpu.CompilerParams(
            dimension_semantics=("parallel", "arbitrary")),
    )(x, pad, params["wemb"], params["bemb"],
      params["norm1"], params["wqkv"], params["bqkv"], params["wo"],
      params["bo"], params["norm2"], params["w1"], params["b1"],
      params["w2"], params["b2"], rel)


# ----------------------------------- main -----------------------------------

if __name__ == "__main__":
    d_model, d_pose, n_layers, n_heads = 32, 16, 2, 4
    B, T = 2, 8

    key = jax.random.PRNGKey(0)
    k_params, k_x, k_kf = jax.random.split(key, 3)

    params = init_params(k_params, d_model, d_pose, n_layers, n_heads,
                         max_len=T)
    x = jax.random.normal(k_x, (B, T, d_pose), jnp.float32)
    keyframes = jax.random.bernoulli(k_kf, 0.5, (B, T)).astype(jnp.int32)
    # ensure at least one unmasked key per batch row (avoid fully-masked rows)
    keyframes = keyframes.at[:, 0].set(1)

    out = jax.jit(citl_encoder)(params, x, keyframes)
    jax.block_until_ready(out)
    assert out.shape == (B, T, d_model)
    assert bool(jnp.all(jnp.isfinite(out)))
    print("KERNEL_OK")
</pallas_src>

<mosaic_0001>
module attributes {stable_mosaic.version = 11 : i64} {
  func.func @_encoder_kernel(%arg0: i32, %arg1: i32, %arg2: memref<1x8x16xf32, #tpu.memory_space<vmem>>, %arg3: memref<1x1x8xf32, #tpu.memory_space<vmem>>, %arg4: memref<16x32xbf16, #tpu.memory_space<vmem>>, %arg5: memref<1x32xf32, #tpu.memory_space<vmem>>, %arg6: memref<1x1x32xf32, #tpu.memory_space<vmem>>, %arg7: memref<1x32x96xbf16, #tpu.memory_space<vmem>>, %arg8: memref<1x1x96xf32, #tpu.memory_space<vmem>>, %arg9: memref<1x32x32xbf16, #tpu.memory_space<vmem>>, %arg10: memref<1x1x32xf32, #tpu.memory_space<vmem>>, %arg11: memref<1x1x32xf32, #tpu.memory_space<vmem>>, %arg12: memref<1x32x128xbf16, #tpu.memory_space<vmem>>, %arg13: memref<1x1x128xf32, #tpu.memory_space<vmem>>, %arg14: memref<1x128x32xbf16, #tpu.memory_space<vmem>>, %arg15: memref<1x1x32xf32, #tpu.memory_space<vmem>>, %arg16: memref<1x4x8x8xf32, #tpu.memory_space<vmem>>, %arg17: memref<1x8x32xf32, #tpu.memory_space<vmem>>) attributes {dimension_semantics = [#tpu.dimension_semantics<parallel>, #tpu.dimension_semantics<arbitrary>], iteration_bounds = array<i64: 2, 2>, scalar_prefetch = 0 : i64, scratch_operands = 0 : i64, tpu.core_type = #tpu.core_type<tc>, window_params = [{transform_indices = @transform_0, window_bounds = array<i64: 1, 8, 16>}, {transform_indices = @transform_1, window_bounds = array<i64: 1, 1, 8>}, {pipeline_mode = #tpu.pipeline_mode<synchronous>, transform_indices = @transform_2, window_bounds = array<i64: 16, 32>}, {pipeline_mode = #tpu.pipeline_mode<synchronous>, transform_indices = @transform_3, window_bounds = array<i64: 1, 32>}, {transform_indices = @transform_4, window_bounds = array<i64: 1, 1, 32>}, {transform_indices = @transform_5, window_bounds = array<i64: 1, 32, 96>}, {transform_indices = @transform_6, window_bounds = array<i64: 1, 1, 96>}, {transform_indices = @transform_7, window_bounds = array<i64: 1, 32, 32>}, {transform_indices = @transform_8, window_bounds = array<i64: 1, 1, 32>}, {transform_indices = @transform_9, window_bounds = array<i64: 1, 1, 32>}, {transform_indices = @transform_10, window_bounds = array<i64: 1, 32, 128>}, {transform_indices = @transform_11, window_bounds = array<i64: 1, 1, 128>}, {transform_indices = @transform_12, window_bounds = array<i64: 1, 128, 32>}, {transform_indices = @transform_13, window_bounds = array<i64: 1, 1, 32>}, {transform_indices = @transform_14, window_bounds = array<i64: 1, 4, 8, 8>}, {transform_indices = @transform_15, window_bounds = array<i64: 1, 8, 32>}]} {
    %c0_i32 = arith.constant 0 : i32
    %0 = arith.cmpi eq, %arg1, %c0_i32 : i32
    %1 = arith.extui %0 : i1 to i32
    %c0_i32_0 = arith.constant 0 : i32
    %2 = arith.cmpi ne, %1, %c0_i32_0 : i32
    scf.if %2 {
      %c0_85 = arith.constant 0 : index
      %c0_86 = arith.constant 0 : index
      %c0_87 = arith.constant 0 : index
      %185 = vector.load %arg2[%c0_85, %c0_86, %c0_87] : memref<1x8x16xf32, #tpu.memory_space<vmem>>, vector<1x8x16xf32>
      %186 = vector.shape_cast %185 : vector<1x8x16xf32> to vector<8x16xf32>
      %187 = arith.truncf %186 : vector<8x16xf32> to vector<8x16xbf16>
      %c0_88 = arith.constant 0 : index
      %c0_89 = arith.constant 0 : index
      %188 = vector.load %arg4[%c0_88, %c0_89] : memref<16x32xbf16, #tpu.memory_space<vmem>>, vector<16x32xbf16>
      %cst_90 = arith.constant dense<0.000000e+00> : vector<8x32xf32>
      %189 = tpu.matmul %187, %188, %cst_90 {dimension_numbers = #tpu.dot_dimension_numbers<[1], [0], [0], [1], [0, 0, 1, 1], [], []>} : vector<8x16xbf16>, vector<16x32xbf16>, vector<8x32xf32> -> vector<8x32xf32>
      %c0_91 = arith.constant 0 : index
      %c0_92 = arith.constant 0 : index
      %190 = vector.load %arg5[%c0_91, %c0_92] : memref<1x32xf32, #tpu.memory_space<vmem>>, vector<1x32xf32>
      %191 = vector.broadcast %190 : vector<1x32xf32> to vector<8x32xf32>
      %192 = arith.addf %189, %191 : vector<8x32xf32>
      %c0_93 = arith.constant 0 : index
      %c0_94 = arith.constant 0 : index
      %c0_95 = arith.constant 0 : index
      %193 = vector.load %arg17[%c0_93, %c0_94, %c0_95] : memref<1x8x32xf32, #tpu.memory_space<vmem>>, vector<1x8x32xf32>
      %194 = vector.shape_cast %193 : vector<1x8x32xf32> to vector<8x32xf32>
      %195 = vector.shape_cast %192 : vector<8x32xf32> to vector<1x8x32xf32>
      tpu.vector_store %arg17[%c0_93, %c0_94, %c0_95], %195 {strides = array<i32>} : memref<1x8x32xf32, #tpu.memory_space<vmem>>, vector<1x8x32xf32>,
    } else {
    }
    %c0 = arith.constant 0 : index
    %c0_1 = arith.constant 0 : index
    %c0_2 = arith.constant 0 : index
    %3 = vector.load %arg17[%c0, %c0_1, %c0_2] : memref<1x8x32xf32, #tpu.memory_space<vmem>>, vector<1x8x32xf32>
    %4 = vector.shape_cast %3 : vector<1x8x32xf32> to vector<8x32xf32>
    %c0_3 = arith.constant 0 : index
    %c0_4 = arith.constant 0 : index
    %c0_5 = arith.constant 0 : index
    %5 = vector.load %arg6[%c0_3, %c0_4, %c0_5] : memref<1x1x32xf32, #tpu.memory_space<vmem>>, vector<1x1x32xf32>
    %6 = vector.shape_cast %5 : vector<1x1x32xf32> to vector<1x32xf32>
    %7 = arith.mulf %4, %4 : vector<8x32xf32>
    %cst = arith.constant dense<0.000000e+00> : vector<8xf32>
    %8 = vector.multi_reduction <add>, %7, %cst [1] : vector<8x32xf32> to vector<8xf32>
    %9 = vector.shape_cast %8 : vector<8xf32> to vector<8x1xf32>
    %cst_6 = arith.constant 3.200000e+01 : f32
    %10 = vector.broadcast %cst_6 : f32 to vector<8x1xf32>
    %11 = arith.divf %9, %10 : vector<8x1xf32>
    %cst_7 = arith.constant 9.99999997E-7 : f32
    %12 = vector.broadcast %cst_7 : f32 to vector<8x1xf32>
    %13 = arith.addf %11, %12 : vector<8x1xf32>
    %14 = math.rsqrt %13 : vector<8x1xf32>
    %15 = vector.broadcast %14 : vector<8x1xf32> to vector<8x32xf32>
    %16 = arith.mulf %4, %15 : vector<8x32xf32>
    %17 = vector.broadcast %6 : vector<1x32xf32> to vector<8x32xf32>
    %18 = arith.mulf %16, %17 : vector<8x32xf32>
    %19 = arith.truncf %18 : vector<8x32xf32> to vector<8x32xbf16>
    %c0_8 = arith.constant 0 : index
    %c0_9 = arith.constant 0 : index
    %c0_10 = arith.constant 0 : index
    %20 = vector.load %arg7[%c0_8, %c0_9, %c0_10] : memref<1x32x96xbf16, #tpu.memory_space<vmem>>, vector<1x32x96xbf16>
    %21 = vector.shape_cast %20 : vector<1x32x96xbf16> to vector<32x96xbf16>
    %cst_11 = arith.constant dense<0.000000e+00> : vector<8x96xf32>
    %22 = tpu.matmul %19, %21, %cst_11 {dimension_numbers = #tpu.dot_dimension_numbers<[1], [0], [0], [1], [0, 0, 1, 1], [], []>} : vector<8x32xbf16>, vector<32x96xbf16>, vector<8x96xf32> -> vector<8x96xf32>
    %c0_12 = arith.constant 0 : index
    %c0_13 = arith.constant 0 : index
    %c0_14 = arith.constant 0 : index
    %23 = vector.load %arg8[%c0_12, %c0_13, %c0_14] : memref<1x1x96xf32, #tpu.memory_space<vmem>>, vector<1x1x96xf32>
    %24 = vector.shape_cast %23 : vector<1x1x96xf32> to vector<1x96xf32>
    %25 = vector.broadcast %24 : vector<1x96xf32> to vector<8x96xf32>
    %26 = arith.addf %22, %25 : vector<8x96xf32>
    %27 = vector.extract_strided_slice %26 {offsets = [0, 0], sizes = [8, 32], strides = [1, 1]} : vector<8x96xf32> to vector<8x32xf32>
    %28 = vector.extract_strided_slice %26 {offsets = [0, 32], sizes = [8, 32], strides = [1, 1]} : vector<8x96xf32> to vector<8x32xf32>
    %29 = vector.extract_strided_slice %26 {offsets = [0, 64], sizes = [8, 32], strides = [1, 1]} : vector<8x96xf32> to vector<8x32xf32>
    %c0_15 = arith.constant 0 : index
    %c0_16 = arith.constant 0 : index
    %c0_17 = arith.constant 0 : index
    %30 = vector.load %arg3[%c0_15, %c0_16, %c0_17] : memref<1x1x8xf32, #tpu.memory_space<vmem>>, vector<1x1x8xf32>
    %31 = vector.shape_cast %30 : vector<1x1x8xf32> to vector<1x8xf32>
    %32 = vector.extract_strided_slice %27 {offsets = [0, 0], sizes = [8, 8], strides = [1, 1]} : vector<8x32xf32> to vector<8x8xf32>
    %33 = vector.extract_strided_slice %28 {offsets = [0, 0], sizes = [8, 8], strides = [1, 1]} : vector<8x32xf32> to vector<8x8xf32>
    %34 = vector.extract_strided_slice %29 {offsets = [0, 0], sizes = [8, 8], strides = [1, 1]} : vector<8x32xf32> to vector<8x8xf32>
    %cst_18 = arith.constant dense<0.000000e+00> : vector<8x8xf32>
    %35 = tpu.matmul %32, %33, %cst_18 {dimension_numbers = #tpu.dot_dimension_numbers<[1], [1], [0], [0], [0, 0, 1, 0], [], []>} : vector<8x8xf32>, vector<8x8xf32>, vector<8x8xf32> -> vector<8x8xf32>
    %cst_19 = arith.constant 0.353553385 : f32
    %36 = vector.broadcast %cst_19 : f32 to vector<8x8xf32>
    %37 = arith.mulf %35, %36 : vector<8x8xf32>
    %c0_20 = arith.constant 0 : index
    %c0_21 = arith.constant 0 : index
    %c0_22 = arith.constant 0 : index
    %c0_23 = arith.constant 0 : index
    %38 = vector.load %arg16[%c0_20, %c0_21, %c0_22, %c0_23] : memref<1x4x8x8xf32, #tpu.memory_space<vmem>>, vector<1x1x8x8xf32>
    %39 = vector.shape_cast %38 : vector<1x1x8x8xf32> to vector<8x8xf32>
    %40 = arith.addf %37, %39 : vector<8x8xf32>
    %41 = vector.broadcast %31 : vector<1x8xf32> to vector<8x8xf32>
    %42 = arith.addf %40, %41 : vector<8x8xf32>
    %cst_24 = arith.constant dense<0xFF800000> : vector<8xf32>
    %43 = vector.multi_reduction <maximumf>, %42, %cst_24 [1] : vector<8x8xf32> to vector<8xf32>
    %44 = vector.shape_cast %43 : vector<8xf32> to vector<8x1xf32>
    %45 = vector.broadcast %44 : vector<8x1xf32> to vector<8x8xf32>
    %46 = arith.subf %42, %45 : vector<8x8xf32>
    %47 = math.exp %46 : vector<8x8xf32>
    %cst_25 = arith.constant dense<0.000000e+00> : vector<8xf32>
    %48 = vector.multi_reduction <add>, %47, %cst_25 [1] : vector<8x8xf32> to vector<8xf32>
    %49 = vector.shape_cast %48 : vector<8xf32> to vector<8x1xf32>
    %50 = tpu.reciprocal %49 {approx = true} : vector<8x1xf32> -> vector<8x1xf32>
    %51 = vector.broadcast %50 : vector<8x1xf32> to vector<8x8xf32>
    %52 = arith.mulf %47, %51 : vector<8x8xf32>
    %53 = arith.truncf %52 : vector<8x8xf32> to vector<8x8xbf16>
    %54 = arith.truncf %34 : vector<8x8xf32> to vector<8x8xbf16>
    %cst_26 = arith.constant dense<0.000000e+00> : vector<8x8xf32>
    %55 = tpu.matmul %53, %54, %cst_26 {dimension_numbers = #tpu.dot_dimension_numbers<[1], [0], [0], [1], [0, 0, 1, 1], [], []>} : vector<8x8xbf16>, vector<8x8xbf16>, vector<8x8xf32> -> vector<8x8xf32>
    %56 = vector.extract_strided_slice %27 {offsets = [0, 8], sizes = [8, 8], strides = [1, 1]} : vector<8x32xf32> to vector<8x8xf32>
    %57 = vector.extract_strided_slice %28 {offsets = [0, 8], sizes = [8, 8], strides = [1, 1]} : vector<8x32xf32> to vector<8x8xf32>
    %58 = vector.extract_strided_slice %29 {offsets = [0, 8], sizes = [8, 8], strides = [1, 1]} : vector<8x32xf32> to vector<8x8xf32>
    %cst_27 = arith.constant dense<0.000000e+00> : vector<8x8xf32>
    %59 = tpu.matmul %56, %57, %cst_27 {dimension_numbers = #tpu.dot_dimension_numbers<[1], [1], [0], [0], [0, 0, 1, 0], [], []>} : vector<8x8xf32>, vector<8x8xf32>, vector<8x8xf32> -> vector<8x8xf32>
    %cst_28 = arith.constant 0.353553385 : f32
    %60 = vector.broadcast %cst_28 : f32 to vector<8x8xf32>
    %61 = arith.mulf %59, %60 : vector<8x8xf32>
    %c0_29 = arith.constant 0 : index
    %c1 = arith.constant 1 : index
    %c0_30 = arith.constant 0 : index
    %c0_31 = arith.constant 0 : index
    %62 = vector.load %arg16[%c0_29, %c1, %c0_30, %c0_31] : memref<1x4x8x8xf32, #tpu.memory_space<vmem>>, vector<1x1x8x8xf32>
    %63 = vector.shape_cast %62 : vector<1x1x8x8xf32> to vector<8x8xf32>
    %64 = arith.addf %61, %63 : vector<8x8xf32>
    %65 = vector.broadcast %31 : vector<1x8xf32> to vector<8x8xf32>
    %66 = arith.addf %64, %65 : vector<8x8xf32>
    %cst_32 = arith.constant dense<0xFF800000> : vector<8xf32>
    %67 = vector.multi_reduction <maximumf>, %66, %cst_32 [1] : vector<8x8xf32> to vector<8xf32>
    %68 = vector.shape_cast %67 : vector<8xf32> to vector<8x1xf32>
    %69 = vector.broadcast %68 : vector<8x1xf32> to vector<8x8xf32>
    %70 = arith.subf %66, %69 : vector<8x8xf32>
    %71 = math.exp %70 : vector<8x8xf32>
    %cst_33 = arith.constant dense<0.000000e+00> : vector<8xf32>
    %72 = vector.multi_reduction <add>, %71, %cst_33 [1] : vector<8x8xf32> to vector<8xf32>
    %73 = vector.shape_cast %72 : vector<8xf32> to vector<8x1xf32>
    %74 = tpu.reciprocal %73 {approx = true} : vector<8x1xf32> -> vector<8x1xf32>
    %75 = vector.broadcast %74 : vector<8x1xf32> to vector<8x8xf32>
    %76 = arith.mulf %71, %75 : vector<8x8xf32>
    %77 = arith.truncf %76 : vector<8x8xf32> to vector<8x8xbf16>
    %78 = arith.truncf %58 : vector<8x8xf32> to vector<8x8xbf16>
    %cst_34 = arith.constant dense<0.000000e+00> : vector<8x8xf32>
    %79 = tpu.matmul %77, %78, %cst_34 {dimension_numbers = #tpu.dot_dimension_numbers<[1], [0], [0], [1], [0, 0, 1, 1], [], []>} : vector<8x8xbf16>, vector<8x8xbf16>, vector<8x8xf32> -> vector<8x8xf32>
    %80 = vector.extract_strided_slice %27 {offsets = [0, 16], sizes = [8, 8], strides = [1, 1]} : vector<8x32xf32> to vector<8x8xf32>
    %81 = vector.extract_strided_slice %28 {offsets = [0, 16], sizes = [8, 8], strides = [1, 1]} : vector<8x32xf32> to vector<8x8xf32>
    %82 = vector.extract_strided_slice %29 {offsets = [0, 16], sizes = [8, 8], strides = [1, 1]} : vector<8x32xf32> to vector<8x8xf32>
    %cst_35 = arith.constant dense<0.000000e+00> : vector<8x8xf32>
    %83 = tpu.matmul %80, %81, %cst_35 {dimension_numbers = #tpu.dot_dimension_numbers<[1], [1], [0], [0], [0, 0, 1, 0], [], []>} : vector<8x8xf32>, vector<8x8xf32>, vector<8x8xf32> -> vector<8x8xf32>
    %cst_36 = arith.constant 0.353553385 : f32
    %84 = vector.broadcast %cst_36 : f32 to vector<8x8xf32>
    %85 = arith.mulf %83, %84 : vector<8x8xf32>
    %c0_37 = arith.constant 0 : index
    %c2 = arith.constant 2 : index
    %c0_38 = arith.constant 0 : index
    %c0_39 = arith.constant 0 : index
    %86 = vector.load %arg16[%c0_37, %c2, %c0_38, %c0_39] : memref<1x4x8x8xf32, #tpu.memory_space<vmem>>, vector<1x1x8x8xf32>
    %87 = vector.shape_cast %86 : vector<1x1x8x8xf32> to vector<8x8xf32>
    %88 = arith.addf %85, %87 : vector<8x8xf32>
    %89 = vector.broadcast %31 : vector<1x8xf32> to vector<8x8xf32>
    %90 = arith.addf %88, %89 : vector<8x8xf32>
    %cst_40 = arith.constant dense<0xFF800000> : vector<8xf32>
    %91 = vector.multi_reduction <maximumf>, %90, %cst_40 [1] : vector<8x8xf32> to vector<8xf32>
    %92 = vector.shape_cast %91 : vector<8xf32> to vector<8x1xf32>
    %93 = vector.broadcast %92 : vector<8x1xf32> to vector<8x8xf32>
    %94 = arith.subf %90, %93 : vector<8x8xf32>
    %95 = math.exp %94 : vector<8x8xf32>
    %cst_41 = arith.constant dense<0.000000e+00> : vector<8xf32>
    %96 = vector.multi_reduction <add>, %95, %cst_41 [1] : vector<8x8xf32> to vector<8xf32>
    %97 = vector.shape_cast %96 : vector<8xf32> to vector<8x1xf32>
    %98 = tpu.reciprocal %97 {approx = true} : vector<8x1xf32> -> vector<8x1xf32>
    %99 = vector.broadcast %98 : vector<8x1xf32> to vector<8x8xf32>
    %100 = arith.mulf %95, %99 : vector<8x8xf32>
    %101 = arith.truncf %100 : vector<8x8xf32> to vector<8x8xbf16>
    %102 = arith.truncf %82 : vector<8x8xf32> to vector<8x8xbf16>
    %cst_42 = arith.constant dense<0.000000e+00> : vector<8x8xf32>
    %103 = tpu.matmul %101, %102, %cst_42 {dimension_numbers = #tpu.dot_dimension_numbers<[1], [0], [0], [1], [0, 0, 1, 1], [], []>} : vector<8x8xbf16>, vector<8x8xbf16>, vector<8x8xf32> -> vector<8x8xf32>
    %104 = vector.extract_strided_slice %27 {offsets = [0, 24], sizes = [8, 8], strides = [1, 1]} : vector<8x32xf32> to vector<8x8xf32>
    %105 = vector.extract_strided_slice %28 {offsets = [0, 24], sizes = [8, 8], strides = [1, 1]} : vector<8x32xf32> to vector<8x8xf32>
    %106 = vector.extract_strided_slice %29 {offsets = [0, 24], sizes = [8, 8], strides = [1, 1]} : vector<8x32xf32> to vector<8x8xf32>
    %cst_43 = arith.constant dense<0.000000e+00> : vector<8x8xf32>
    %107 = tpu.matmul %104, %105, %cst_43 {dimension_numbers = #tpu.dot_dimension_numbers<[1], [1], [0], [0], [0, 0, 1, 0], [], []>} : vector<8x8xf32>, vector<8x8xf32>, vector<8x8xf32> -> vector<8x8xf32>
    %cst_44 = arith.constant 0.353553385 : f32
    %108 = vector.broadcast %cst_44 : f32 to vector<8x8xf32>
    %109 = arith.mulf %107, %108 : vector<8x8xf32>
    %c0_45 = arith.constant 0 : index
    %c3 = arith.constant 3 : index
    %c0_46 = arith.constant 0 : index
    %c0_47 = arith.constant 0 : index
    %110 = vector.load %arg16[%c0_45, %c3, %c0_46, %c0_47] : memref<1x4x8x8xf32, #tpu.memory_space<vmem>>, vector<1x1x8x8xf32>
    %111 = vector.shape_cast %110 : vector<1x1x8x8xf32> to vector<8x8xf32>
    %112 = arith.addf %109, %111 : vector<8x8xf32>
    %113 = vector.broadcast %31 : vector<1x8xf32> to vector<8x8xf32>
    %114 = arith.addf %112, %113 : vector<8x8xf32>
    %cst_48 = arith.constant dense<0xFF800000> : vector<8xf32>
    %115 = vector.multi_reduction <maximumf>, %114, %cst_48 [1] : vector<8x8xf32> to vector<8xf32>
    %116 = vector.shape_cast %115 : vector<8xf32> to vector<8x1xf32>
    %117 = vector.broadcast %116 : vector<8x1xf32> to vector<8x8xf32>
    %118 = arith.subf %114, %117 : vector<8x8xf32>
    %119 = math.exp %118 : vector<8x8xf32>
    %cst_49 = arith.constant dense<0.000000e+00> : vector<8xf32>
    %120 = vector.multi_reduction <add>, %119, %cst_49 [1] : vector<8x8xf32> to vector<8xf32>
    %121 = vector.shape_cast %120 : vector<8xf32> to vector<8x1xf32>
    %122 = tpu.reciprocal %121 {approx = true} : vector<8x1xf32> -> vector<8x1xf32>
    %123 = vector.broadcast %122 : vector<8x1xf32> to vector<8x8xf32>
    %124 = arith.mulf %119, %123 : vector<8x8xf32>
    %125 = arith.truncf %124 : vector<8x8xf32> to vector<8x8xbf16>
    %126 = arith.truncf %106 : vector<8x8xf32> to vector<8x8xbf16>
    %cst_50 = arith.constant dense<0.000000e+00> : vector<8x8xf32>
    %127 = tpu.matmul %125, %126, %cst_50 {dimension_numbers = #tpu.dot_dimension_numbers<[1], [0], [0], [1], [0, 0, 1, 1], [], []>} : vector<8x8xbf16>, vector<8x8xbf16>, vector<8x8xf32> -> vector<8x8xf32>
    %128 = tpu.concatenate %55, %79, %103, %127 in 1 : vector<8x8xf32>, vector<8x8xf32>, vector<8x8xf32>, vector<8x8xf32> -> vector<8x32xf32>
    %129 = arith.truncf %128 : vector<8x32xf32> to vector<8x32xbf16>
    %c0_51 = arith.constant 0 : index
    %c0_52 = arith.constant 0 : index
    %c0_53 = arith.constant 0 : index
    %130 = vector.load %arg9[%c0_51, %c0_52, %c0_53] : memref<1x32x32xbf16, #tpu.memory_space<vmem>>, vector<1x32x32xbf16>
    %131 = vector.shape_cast %130 : vector<1x32x32xbf16> to vector<32x32xbf16>
    %cst_54 = arith.constant dense<0.000000e+00> : vector<8x32xf32>
    %132 = tpu.matmul %129, %131, %cst_54 {dimension_numbers = #tpu.dot_dimension_numbers<[1], [0], [0], [1], [0, 0, 1, 1], [], []>} : vector<8x32xbf16>, vector<32x32xbf16>, vector<8x32xf32> -> vector<8x32xf32>
    %133 = arith.addf %4, %132 : vector<8x32xf32>
    %c0_55 = arith.constant 0 : index
    %c0_56 = arith.constant 0 : index
    %c0_57 = arith.constant 0 : index
    %134 = vector.load %arg10[%c0_55, %c0_56, %c0_57] : memref<1x1x32xf32, #tpu.memory_space<vmem>>, vector<1x1x32xf32>
    %135 = vector.shape_cast %134 : vector<1x1x32xf32> to vector<1x32xf32>
    %136 = vector.broadcast %135 : vector<1x32xf32> to vector<8x32xf32>
    %137 = arith.addf %133, %136 : vector<8x32xf32>
    %c0_58 = arith.constant 0 : index
    %c0_59 = arith.constant 0 : index
    %c0_60 = arith.constant 0 : index
    %138 = vector.load %arg11[%c0_58, %c0_59, %c0_60] : memref<1x1x32xf32, #tpu.memory_space<vmem>>, vector<1x1x32xf32>
    %139 = vector.shape_cast %138 : vector<1x1x32xf32> to vector<1x32xf32>
    %140 = arith.mulf %137, %137 : vector<8x32xf32>
    %cst_61 = arith.constant dense<0.000000e+00> : vector<8xf32>
    %141 = vector.multi_reduction <add>, %140, %cst_61 [1] : vector<8x32xf32> to vector<8xf32>
    %142 = vector.shape_cast %141 : vector<8xf32> to vector<8x1xf32>
    %cst_62 = arith.constant 3.200000e+01 : f32
    %143 = vector.broadcast %cst_62 : f32 to vector<8x1xf32>
    %144 = arith.divf %142, %143 : vector<8x1xf32>
    %cst_63 = arith.constant 9.99999997E-7 : f32
    %145 = vector.broadcast %cst_63 : f32 to vector<8x1xf32>
    %146 = arith.addf %144, %145 : vector<8x1xf32>
    %147 = math.rsqrt %146 : vector<8x1xf32>
    %148 = vector.broadcast %147 : vector<8x1xf32> to vector<8x32xf32>
    %149 = arith.mulf %137, %148 : vector<8x32xf32>
    %150 = vector.broadcast %139 : vector<1x32xf32> to vector<8x32xf32>
    %151 = arith.mulf %149, %150 : vector<8x32xf32>
    %152 = arith.truncf %151 : vector<8x32xf32> to vector<8x32xbf16>
    %c0_64 = arith.constant 0 : index
    %c0_65 = arith.constant 0 : index
    %c0_66 = arith.constant 0 : index
    %153 = vector.load %arg12[%c0_64, %c0_65, %c0_66] : memref<1x32x128xbf16, #tpu.memory_space<vmem>>, vector<1x32x128xbf16>
    %154 = vector.shape_cast %153 : vector<1x32x128xbf16> to vector<32x128xbf16>
    %cst_67 = arith.constant dense<0.000000e+00> : vector<8x128xf32>
    %155 = tpu.matmul %152, %154, %cst_67 {dimension_numbers = #tpu.dot_dimension_numbers<[1], [0], [0], [1], [0, 0, 1, 1], [], []>} : vector<8x32xbf16>, vector<32x128xbf16>, vector<8x128xf32> -> vector<8x128xf32>
    %c0_68 = arith.constant 0 : index
    %c0_69 = arith.constant 0 : index
    %c0_70 = arith.constant 0 : index
    %156 = vector.load %arg13[%c0_68, %c0_69, %c0_70] : memref<1x1x128xf32, #tpu.memory_space<vmem>>, vector<1x1x128xf32>
    %157 = vector.shape_cast %156 : vector<1x1x128xf32> to vector<1x128xf32>
    %158 = vector.broadcast %157 : vector<1x128xf32> to vector<8x128xf32>
    %159 = arith.addf %155, %158 : vector<8x128xf32>
    %cst_71 = arith.constant 5.000000e-01 : f32
    %160 = vector.broadcast %cst_71 : f32 to vector<8x128xf32>
    %161 = arith.mulf %160, %159 : vector<8x128xf32>
    %cst_72 = arith.constant 4.471500e-02 : f32
    %162 = vector.broadcast %cst_72 : f32 to vector<8x128xf32>
    %163 = arith.mulf %162, %159 : vector<8x128xf32>
    %164 = arith.mulf %163, %159 : vector<8x128xf32>
    %165 = arith.mulf %164, %159 : vector<8x128xf32>
    %166 = arith.addf %159, %165 : vector<8x128xf32>
    %cst_73 = arith.constant 0.797884583 : f32
    %167 = vector.broadcast %cst_73 : f32 to vector<8x128xf32>
    %168 = arith.mulf %167, %166 : vector<8x128xf32>
    %169 = math.tanh %168 : vector<8x128xf32>
    %cst_74 = arith.constant 1.000000e+00 : f32
    %170 = vector.broadcast %cst_74 : f32 to vector<8x128xf32>
    %171 = arith.addf %170, %169 : vector<8x128xf32>
    %172 = arith.mulf %161, %171 : vector<8x128xf32>
    %173 = arith.truncf %172 : vector<8x128xf32> to vector<8x128xbf16>
    %c0_75 = arith.constant 0 : index
    %c0_76 = arith.constant 0 : index
    %c0_77 = arith.constant 0 : index
    %174 = vector.load %arg14[%c0_75, %c0_76, %c0_77] : memref<1x128x32xbf16, #tpu.memory_space<vmem>>, vector<1x128x32xbf16>
    %175 = vector.shape_cast %174 : vector<1x128x32xbf16> to vector<128x32xbf16>
    %cst_78 = arith.constant dense<0.000000e+00> : vector<8x32xf32>
    %176 = tpu.matmul %173, %175, %cst_78 {dimension_numbers = #tpu.dot_dimension_numbers<[1], [0], [0], [1], [0, 0, 1, 1], [], []>} : vector<8x128xbf16>, vector<128x32xbf16>, vector<8x32xf32> -> vector<8x32xf32>
    %c0_79 = arith.constant 0 : index
    %c0_80 = arith.constant 0 : index
    %c0_81 = arith.constant 0 : index
    %177 = vector.load %arg15[%c0_79, %c0_80, %c0_81] : memref<1x1x32xf32, #tpu.memory_space<vmem>>, vector<1x1x32xf32>
    %178 = vector.shape_cast %177 : vector<1x1x32xf32> to vector<1x32xf32>
    %179 = vector.broadcast %178 : vector<1x32xf32> to vector<8x32xf32>
    %180 = arith.addf %176, %179 : vector<8x32xf32>
    %181 = arith.addf %137, %180 : vector<8x32xf32>
    %c0_82 = arith.constant 0 : index
    %c0_83 = arith.constant 0 : index
    %c0_84 = arith.constant 0 : index
    %182 = vector.load %arg17[%c0_82, %c0_83, %c0_84] : memref<1x8x32xf32, #tpu.memory_space<vmem>>, vector<1x8x32xf32>
    %183 = vector.shape_cast %182 : vector<1x8x32xf32> to vector<8x32xf32>
    %184 = vector.shape_cast %181 : vector<8x32xf32> to vector<1x8x32xf32>
    tpu.vector_store %arg17[%c0_82, %c0_83, %c0_84], %184 {strides = array<i32>} : memref<1x8x32xf32, #tpu.memory_space<vmem>>, vector<1x8x32xf32>,
    return
  }
  func.func @transform_0(%arg0: i32, %arg1: i32) -> (i32, i32, i32) {
    %c0_i32 = arith.constant 0 : i32
    %c0_i32_0 = arith.constant 0 : i32
    %c0_i32_1 = arith.constant 0 : i32
    return %arg0, %c0_i32, %c0_i32_0 : i32, i32, i32
  }
  func.func @transform_1(%arg0: i32, %arg1: i32) -> (i32, i32, i32) {
    %c0_i32 = arith.constant 0 : i32
    %c0_i32_0 = arith.constant 0 : i32
    %c0_i32_1 = arith.constant 0 : i32
    return %arg0, %c0_i32, %c0_i32_0 : i32, i32, i32
  }
  func.func @transform_2(%arg0: i32, %arg1: i32) -> (i32, i32) {
    %c0_i32 = arith.constant 0 : i32
    %c0_i32_0 = arith.constant 0 : i32
    %c0_i32_1 = arith.constant 0 : i32
    return %c0_i32, %c0_i32_0 : i32, i32
  }
  func.func @transform_3(%arg0: i32, %arg1: i32) -> (i32, i32) {
    %c0_i32 = arith.constant 0 : i32
    %c0_i32_0 = arith.constant 0 : i32
    %c0_i32_1 = arith.constant 0 : i32
    return %c0_i32, %c0_i32_0 : i32, i32
  }
  func.func @transform_4(%arg0: i32, %arg1: i32) -> (i32, i32, i32) {
    %c0_i32 = arith.constant 0 : i32
    %c0_i32_0 = arith.constant 0 : i32
    %c0_i32_1 = arith.constant 0 : i32
    return %arg1, %c0_i32, %c0_i32_0 : i32, i32, i32
  }
  func.func @transform_5(%arg0: i32, %arg1: i32) -> (i32, i32, i32) {
    %c0_i32 = arith.constant 0 : i32
    %c0_i32_0 = arith.constant 0 : i32
    %c0_i32_1 = arith.constant 0 : i32
    return %arg1, %c0_i32, %c0_i32_0 : i32, i32, i32
  }
  func.func @transform_6(%arg0: i32, %arg1: i32) -> (i32, i32, i32) {
    %c0_i32 = arith.constant 0 : i32
    %c0_i32_0 = arith.constant 0 : i32
    %c0_i32_1 = arith.constant 0 : i32
    return %arg1, %c0_i32, %c0_i32_0 : i32, i32, i32
  }
  func.func @transform_7(%arg0: i32, %arg1: i32) -> (i32, i32, i32) {
    %c0_i32 = arith.constant 0 : i32
    %c0_i32_0 = arith.constant 0 : i32
    %c0_i32_1 = arith.constant 0 : i32
    return %arg1, %c0_i32, %c0_i32_0 : i32, i32, i32
  }
  func.func @transform_8(%arg0: i32, %arg1: i32) -> (i32, i32, i32) {
    %c0_i32 = arith.constant 0 : i32
    %c0_i32_0 = arith.constant 0 : i32
    %c0_i32_1 = arith.constant 0 : i32
    return %arg1, %c0_i32, %c0_i32_0 : i32, i32, i32
  }
  func.func @transform_9(%arg0: i32, %arg1: i32) -> (i32, i32, i32) {
    %c0_i32 = arith.constant 0 : i32
    %c0_i32_0 = arith.constant 0 : i32
    %c0_i32_1 = arith.constant 0 : i32
    return %arg1, %c0_i32, %c0_i32_0 : i32, i32, i32
  }
  func.func @transform_10(%arg0: i32, %arg1: i32) -> (i32, i32, i32) {
    %c0_i32 = arith.constant 0 : i32
    %c0_i32_0 = arith.constant 0 : i32
    %c0_i32_1 = arith.constant 0 : i32
    return %arg1, %c0_i32, %c0_i32_0 : i32, i32, i32
  }
  func.func @transform_11(%arg0: i32, %arg1: i32) -> (i32, i32, i32) {
    %c0_i32 = arith.constant 0 : i32
    %c0_i32_0 = arith.constant 0 : i32
    %c0_i32_1 = arith.constant 0 : i32
    return %arg1, %c0_i32, %c0_i32_0 : i32, i32, i32
  }
  func.func @transform_12(%arg0: i32, %arg1: i32) -> (i32, i32, i32) {
    %c0_i32 = arith.constant 0 : i32
    %c0_i32_0 = arith.constant 0 : i32
    %c0_i32_1 = arith.constant 0 : i32
    return %arg1, %c0_i32, %c0_i32_0 : i32, i32, i32
  }
  func.func @transform_13(%arg0: i32, %arg1: i32) -> (i32, i32, i32) {
    %c0_i32 = arith.constant 0 : i32
    %c0_i32_0 = arith.constant 0 : i32
    %c0_i32_1 = arith.constant 0 : i32
    return %arg1, %c0_i32, %c0_i32_0 : i32, i32, i32
  }
  func.func @transform_14(%arg0: i32, %arg1: i32) -> (i32, i32, i32, i32) {
    %c0_i32 = arith.constant 0 : i32
    %c0_i32_0 = arith.constant 0 : i32
    %c0_i32_1 = arith.constant 0 : i32
    %c0_i32_2 = arith.constant 0 : i32
    return %arg1, %c0_i32, %c0_i32_0, %c0_i32_1 : i32, i32, i32, i32
  }
  func.func @transform_15(%arg0: i32, %arg1: i32) -> (i32, i32, i32) {
    %c0_i32 = arith.constant 0 : i32
    %c0_i32_0 = arith.constant 0 : i32
    %c0_i32_1 = arith.constant 0 : i32
    return %arg0, %c0_i32, %c0_i32_0 : i32, i32, i32
  }
}

</mosaic_0001>

<llo_original>
// kernel: citl_encoder.1
$region0: #{citl_encoder.1}
  #allocation0 [shape = 'u32[]', space=smem, size = 0x4, offset = 0x4, fixed_abs, tag = 'smem constant byte address 0x4 - core index']
  #allocation1 [shape = 'u32[72,128]{1,0:T(1,128)}', space=vmem, size = 0x9000, scoped, tag = 'internal scratch']
  %s0 = inlined_call_operand.vmem [shape: f32[2,8,16], index: 0, kind: input, shape index: {}]
  %s1 = inlined_call_operand.vmem [shape: f32[2,1,8], index: 1, kind: input, shape index: {}]
  %s2 = inlined_call_operand.vmem [shape: bf16[16,32], index: 2, kind: input, shape index: {}]
  %s3 = inlined_call_operand.vmem [shape: f32[1,32], index: 3, kind: input, shape index: {}]
  %s4 = inlined_call_operand.vmem [shape: f32[2,1,32], index: 4, kind: input, shape index: {}]
  %s5 = inlined_call_operand.vmem [shape: bf16[2,32,96], index: 5, kind: input, shape index: {}]
  %s6 = inlined_call_operand.vmem [shape: f32[2,1,96], index: 6, kind: input, shape index: {}]
  %s7 = inlined_call_operand.vmem [shape: bf16[2,32,32], index: 7, kind: input, shape index: {}]
  %s8 = inlined_call_operand.vmem [shape: f32[2,1,32], index: 8, kind: input, shape index: {}]
  %s9 = inlined_call_operand.vmem [shape: f32[2,1,32], index: 9, kind: input, shape index: {}]
  %s10 = inlined_call_operand.vmem [shape: bf16[2,32,128], index: 10, kind: input, shape index: {}]
  %s11 = inlined_call_operand.vmem [shape: f32[2,1,128], index: 11, kind: input, shape index: {}]
  %s12 = inlined_call_operand.vmem [shape: bf16[2,128,32], index: 12, kind: input, shape index: {}]
  %s13 = inlined_call_operand.vmem [shape: f32[2,1,32], index: 13, kind: input, shape index: {}]
  %s14 = inlined_call_operand.vmem [shape: f32[2,4,8,8], index: 14, kind: input, shape index: {}]
  %s15 = inlined_call_operand.hbm [shape: f32[2,8,32], index: 15, kind: output, shape index: {}]
  %s16 = sld [smem:[#allocation0]]
  $region97: #{citl_encoder.1} parent=0
    _
  %s18 = ssub.s32 1, %s16
  %s19 = scalar_select 0, %s18, %s16
  $region1: #{citl_encoder.1} parent=0
    #allocation2 [shape = 'u8[8192]{0}', space=vmem, size = 0x2000, scoped, tag = 'output window, operand 0']
    #allocation3 [shape = 's32[2]{0}', space=sflag, size = 0x8, scoped, tag = 'scoped memory for citl_encoder.1']
    %20 = vsyncpa [#allocation3], 0
    %s21 = scalar_lea.sflag [#allocation3], 1
    %22 = vsyncpa %s21, 0
    loop: start=0, step=1, limit=6
    $region2: #{citl_encoder.1} parent=1 // loop_pre_header
      _
    $region3: #{citl_encoder.1} parent=1 // loop_header
      %s24 = sphi 0, %s28
      %p25 = scmp.ge.s32.totalorder %s24, 6
      %s31 = sphi 0, %s43
      %s32 = sphi 0, %s39
      %s33 = sphi 0, %s31
      %s34 = sphi 0, %s32
      %s35 = sphi 0, %s33
      %s36 = sphi 0, %s34
      %s46 = sphi 0, %s48
      %s49 = sphi 0, %s46
      %s50 = sphi 0, %s49
      %s66 = sphi 0, %s50
      %s72 = sphi 0, %s74
      %s75 = sphi 0, %s72
      %s76 = sphi 0, %s75
      %s92 = sphi 0, %s76
      %s96 = sphi 0, %s96
      %s98 = sphi 0, %s96
      %s99 = sphi 0, %s98
      %s113 = sphi 0, %s99
      %s117 = sphi 0, %s117
      %s119 = sphi 0, %s117
      %s120 = sphi 0, %s119
      %s134 = sphi 0, %s120
      %s140 = sphi 0, %s142
      %s143 = sphi 0, %s140
      %s144 = sphi 0, %s143
      %s160 = sphi 0, %s144
      %s166 = sphi 0, %s168
      %s169 = sphi 0, %s166
      %s170 = sphi 0, %s169
      %s186 = sphi 0, %s170
      %s192 = sphi 0, %s194
      %s195 = sphi 0, %s192
      %s196 = sphi 0, %s195
      %s212 = sphi 0, %s196
      %s218 = sphi 0, %s220
      %s221 = sphi 0, %s218
      %s222 = sphi 0, %s221
      %s238 = sphi 0, %s222
      %s244 = sphi 0, %s246
      %s247 = sphi 0, %s244
      %s248 = sphi 0, %s247
      %s264 = sphi 0, %s248
      %s270 = sphi 0, %s272
      %s273 = sphi 0, %s270
      %s274 = sphi 0, %s273
      %s290 = sphi 0, %s274
      %s296 = sphi 0, %s298
      %s299 = sphi 0, %s296
      %s300 = sphi 0, %s299
      %s316 = sphi 0, %s300
      %s322 = sphi 0, %s324
      %s325 = sphi 0, %s322
      %s326 = sphi 0, %s325
      %s342 = sphi 0, %s326
      %s348 = sphi 0, %s350
      %s351 = sphi 0, %s348
      %s352 = sphi 0, %s351
      %s368 = sphi 0, %s352
      %s374 = sphi 0, %s376
      %s377 = sphi 0, %s374
      %s378 = sphi 0, %s377
      %s394 = sphi 0, %s378
      %s400 = sphi 0, %s402
      %s403 = sphi 0, %s400
      %s404 = sphi 0, %s403
      %s420 = sphi 0, %s404
      %s426 = sphi 0, %s428
      %s429 = sphi 0, %s426
      %s430 = sphi 0, %s429
      %s446 = sphi 0, %s430
    $region4: #{citl_encoder.1} parent=1 // loop_header_branch
      %27 = sbr.rel (%p25) target = $region8
    $region5: #{citl_encoder.1} parent=1 // loop_body
      %s29 = ssub.s32 %s24, 1
      %s30 = ssub.s32 %s24, 2
      %s37 = sadd.s32 1, %s32
      %p38 = scmp.ge.s32.totalorder %s37, 2
      %s39 = scalar_select %p38, 0, %s37
      %s40 = sadd.s32 1, %s31
      %s41 = scalar_select %p38, %s40, %s31
      %p42 = scmp.ge.s32.totalorder %s41, 2
      %s43 = scalar_select %p42, 0, %s41
      %s44 = ssub.s32 %s31, %s43
      %p45 = scmp.eq.s32.totalorder %s44, 0
      %s47 = sadd.s32 %s46, 1
      %s48 = scalar_select %p45, %s46, %s47
      %p51 = pneg %p45
      %p52 = scmp.eq.s32.totalorder %s24, 3
      %p53 = por %p51, %p52
      %p54 = scmp.ne.s32.totalorder %s46, %s49
      %p55 = scmp.eq.s32.totalorder %s24, 0
      %p56 = por %p54, %p55
      %p57 = scmp.ne.s32.totalorder %s46, %s49
      %p58 = scmp.eq.s32.totalorder %s29, 3
      %p59 = por %p57, %p58
      %p60 = scmp.ne.s32.totalorder %s49, %s50
      %p61 = scmp.eq.s32.totalorder %s29, 0
      %p62 = por %p60, %p61
      %p63 = scmp.ne.s32.totalorder %s49, %s50
      %p64 = scmp.eq.s32.totalorder %s30, 3
      %p65 = por %p63, %p64
      %p67 = scmp.ne.s32.totalorder %s50, %s66
      %p68 = scmp.eq.s32.totalorder %s30, 0
      %p69 = por %p67, %p68
      %s70 = ssub.s32 %s31, %s43
      %p71 = scmp.eq.s32.totalorder %s70, 0
      %s73 = sadd.s32 %s72, 1
      %s74 = scalar_select %p71, %s72, %s73
      %p77 = pneg %p71
      %p78 = scmp.eq.s32.totalorder %s24, 3
      %p79 = por %p77, %p78
      %p80 = scmp.ne.s32.totalorder %s72, %s75
      %p81 = scmp.eq.s32.totalorder %s24, 0
      %p82 = por %p80, %p81
      %p83 = scmp.ne.s32.totalorder %s72, %s75
      %p84 = scmp.eq.s32.totalorder %s29, 3
      %p85 = por %p83, %p84
      %p86 = scmp.ne.s32.totalorder %s75, %s76
      %p87 = scmp.eq.s32.totalorder %s29, 0
      %p88 = por %p86, %p87
      %p89 = scmp.ne.s32.totalorder %s75, %s76
      %p90 = scmp.eq.s32.totalorder %s30, 3
      %p91 = por %p89, %p90
      %p93 = scmp.ne.s32.totalorder %s76, %s92
      %p94 = scmp.eq.s32.totalorder %s30, 0
      %p95 = por %p93, %p94
      %s97 = sadd.s32 %s96, 1
      %p100 = scmp.eq.s32.totalorder %s24, 3
      %p101 = scmp.ne.s32.totalorder %s96, %s98
      %p102 = scmp.eq.s32.totalorder %s24, 0
      %p103 = por %p101, %p102
      %p104 = scmp.ne.s32.totalorder %s96, %s98
      %p105 = scmp.eq.s32.totalorder %s29, 3
      %p106 = por %p104, %p105
      %p107 = scmp.ne.s32.totalorder %s98, %s99
      %p108 = scmp.eq.s32.totalorder %s29, 0
      %p109 = por %p107, %p108
      %p110 = scmp.ne.s32.totalorder %s98, %s99
      %p111 = scmp.eq.s32.totalorder %s30, 3
      %p112 = por %p110, %p111
      %p114 = scmp.ne.s32.totalorder %s99, %s113
      %p115 = scmp.eq.s32.totalorder %s30, 0
      %p116 = por %p114, %p115
      %s118 = sadd.s32 %s117, 1
      %p121 = scmp.eq.s32.totalorder %s24, 3
      %p122 = scmp.ne.s32.totalorder %s117, %s119
      %p123 = scmp.eq.s32.totalorder %s24, 0
      %p124 = por %p122, %p123
      %p125 = scmp.ne.s32.totalorder %s117, %s119
      %p126 = scmp.eq.s32.totalorder %s29, 3
      %p127 = por %p125, %p126
      %p128 = scmp.ne.s32.totalorder %s119, %s120
      %p129 = scmp.eq.s32.totalorder %s29, 0
      %p130 = por %p128, %p129
      %p131 = scmp.ne.s32.totalorder %s119, %s120
      %p132 = scmp.eq.s32.totalorder %s30, 3
      %p133 = por %p131, %p132
      %p135 = scmp.ne.s32.totalorder %s120, %s134
      %p136 = scmp.eq.s32.totalorder %s30, 0
      %p137 = por %p135, %p136
      %s138 = ssub.s32 %s32, %s39
      %p139 = scmp.eq.s32.totalorder %s138, 0
      %s141 = sadd.s32 %s140, 1
      %s142 = scalar_select %p139, %s140, %s141
      %p145 = pneg %p139
      %p146 = scmp.eq.s32.totalorder %s24, 3
      %p147 = por %p145, %p146
      %p148 = scmp.ne.s32.totalorder %s140, %s143
      %p149 = scmp.eq.s32.totalorder %s24, 0
      %p150 = por %p148, %p149
      %p151 = scmp.ne.s32.totalorder %s140, %s143
      %p152 = scmp.eq.s32.totalorder %s29, 3
      %p153 = por %p151, %p152
      %p154 = scmp.ne.s32.totalorder %s143, %s144
      %p155 = scmp.eq.s32.totalorder %s29, 0
      %p156 = por %p154, %p155
      %p157 = scmp.ne.s32.totalorder %s143, %s144
      %p158 = scmp.eq.s32.totalorder %s30, 3
      %p159 = por %p157, %p158
      %p161 = scmp.ne.s32.totalorder %s144, %s160
      %p162 = scmp.eq.s32.totalorder %s30, 0
      %p163 = por %p161, %p162
      %s164 = ssub.s32 %s32, %s39
      %p165 = scmp.eq.s32.totalorder %s164, 0
      %s167 = sadd.s32 %s166, 1
      %s168 = scalar_select %p165, %s166, %s167
      %p171 = pneg %p165
      %p172 = scmp.eq.s32.totalorder %s24, 3
      %p173 = por %p171, %p172
      %p174 = scmp.ne.s32.totalorder %s166, %s169
      %p175 = scmp.eq.s32.totalorder %s24, 0
      %p176 = por %p174, %p175
      %p177 = scmp.ne.s32.totalorder %s166, %s169
      %p178 = scmp.eq.s32.totalorder %s29, 3
      %p179 = por %p177, %p178
      %p180 = scmp.ne.s32.totalorder %s169, %s170
      %p181 = scmp.eq.s32.totalorder %s29, 0
      %p182 = por %p180, %p181
      %p183 = scmp.ne.s32.totalorder %s169, %s170
      %p184 = scmp.eq.s32.totalorder %s30, 3
      %p185 = por %p183, %p184
      %p187 = scmp.ne.s32.totalorder %s170, %s186
      %p188 = scmp.eq.s32.totalorder %s30, 0
      %p189 = por %p187, %p188
      %s190 = ssub.s32 %s32, %s39
      %p191 = scmp.eq.s32.totalorder %s190, 0
      %s193 = sadd.s32 %s192, 1
      %s194 = scalar_select %p191, %s192, %s193
      %p197 = pneg %p191
      %p198 = scmp.eq.s32.totalorder %s24, 3
      %p199 = por %p197, %p198
      %p200 = scmp.ne.s32.totalorder %s192, %s195
      %p201 = scmp.eq.s32.totalorder %s24, 0
      %p202 = por %p200, %p201
      %p203 = scmp.ne.s32.totalorder %s192, %s195
      %p204 = scmp.eq.s32.totalorder %s29, 3
      %p205 = por %p203, %p204
      %p206 = scmp.ne.s32.totalorder %s195, %s196
      %p207 = scmp.eq.s32.totalorder %s29, 0
      %p208 = por %p206, %p207
      %p209 = scmp.ne.s32.totalorder %s195, %s196
      %p210 = scmp.eq.s32.totalorder %s30, 3
      %p211 = por %p209, %p210
      %p213 = scmp.ne.s32.totalorder %s196, %s212
      %p214 = scmp.eq.s32.totalorder %s30, 0
      %p215 = por %p213, %p214
      %s216 = ssub.s32 %s32, %s39
      %p217 = scmp.eq.s32.totalorder %s216, 0
      %s219 = sadd.s32 %s218, 1
      %s220 = scalar_select %p217, %s218, %s219
      %p223 = pneg %p217
      %p224 = scmp.eq.s32.totalorder %s24, 3
      %p225 = por %p223, %p224
      %p226 = scmp.ne.s32.totalorder %s218, %s221
      %p227 = scmp.eq.s32.totalorder %s24, 0
      %p228 = por %p226, %p227
      %p229 = scmp.ne.s32.totalorder %s218, %s221
      %p230 = scmp.eq.s32.totalorder %s29, 3
      %p231 = por %p229, %p230
      %p232 = scmp.ne.s32.totalorder %s221, %s222
      %p233 = scmp.eq.s32.totalorder %s29, 0
      %p234 = por %p232, %p233
      %p235 = scmp.ne.s32.totalorder %s221, %s222
      %p236 = scmp.eq.s32.totalorder %s30, 3
      %p237 = por %p235, %p236
      %p239 = scmp.ne.s32.totalorder %s222, %s238
      %p240 = scmp.eq.s32.totalorder %s30, 0
      %p241 = por %p239, %p240
      %s242 = ssub.s32 %s32, %s39
      %p243 = scmp.eq.s32.totalorder %s242, 0
      %s245 = sadd.s32 %s244, 1
      %s246 = scalar_select %p243, %s244, %s245
      %p249 = pneg %p243
      %p250 = scmp.eq.s32.totalorder %s24, 3
      %p251 = por %p249, %p250
      %p252 = scmp.ne.s32.totalorder %s244, %s247
      %p253 = scmp.eq.s32.totalorder %s24, 0
      %p254 = por %p252, %p253
      %p255 = scmp.ne.s32.totalorder %s244, %s247
      %p256 = scmp.eq.s32.totalorder %s29, 3
      %p257 = por %p255, %p256
      %p258 = scmp.ne.s32.totalorder %s247, %s248
      %p259 = scmp.eq.s32.totalorder %s29, 0
      %p260 = por %p258, %p259
      %p261 = scmp.ne.s32.totalorder %s247, %s248
      %p262 = scmp.eq.s32.totalorder %s30, 3
      %p263 = por %p261, %p262
      %p265 = scmp.ne.s32.totalorder %s248, %s264
      %p266 = scmp.eq.s32.totalorder %s30, 0
      %p267 = por %p265, %p266
      %s268 = ssub.s32 %s32, %s39
      %p269 = scmp.eq.s32.totalorder %s268, 0
      %s271 = sadd.s32 %s270, 1
      %s272 = scalar_select %p269, %s270, %s271
      %p275 = pneg %p269
      %p276 = scmp.eq.s32.totalorder %s24, 3
      %p277 = por %p275, %p276
      %p278 = scmp.ne.s32.totalorder %s270, %s273
      %p279 = scmp.eq.s32.totalorder %s24, 0
      %p280 = por %p278, %p279
      %p281 = scmp.ne.s32.totalorder %s270, %s273
      %p282 = scmp.eq.s32.totalorder %s29, 3
      %p283 = por %p281, %p282
      %p284 = scmp.ne.s32.totalorder %s273, %s274
      %p285 = scmp.eq.s32.totalorder %s29, 0
      %p286 = por %p284, %p285
      %p287 = scmp.ne.s32.totalorder %s273, %s274
      %p288 = scmp.eq.s32.totalorder %s30, 3
      %p289 = por %p287, %p288
      %p291 = scmp.ne.s32.totalorder %s274, %s290
      %p292 = scmp.eq.s32.totalorder %s30, 0
      %p293 = por %p291, %p292
      %s294 = ssub.s32 %s32, %s39
      %p295 = scmp.eq.s32.totalorder %s294, 0
      %s297 = sadd.s32 %s296, 1
      %s298 = scalar_select %p295, %s296, %s297
      %p301 = pneg %p295
      %p302 = scmp.eq.s32.totalorder %s24, 3
      %p303 = por %p301, %p302
      %p304 = scmp.ne.s32.totalorder %s296, %s299
      %p305 = scmp.eq.s32.totalorder %s24, 0
      %p306 = por %p304, %p305
      %p307 = scmp.ne.s32.totalorder %s296, %s299
      %p308 = scmp.eq.s32.totalorder %s29, 3
      %p309 = por %p307, %p308
      %p310 = scmp.ne.s32.totalorder %s299, %s300
      %p311 = scmp.eq.s32.totalorder %s29, 0
      %p312 = por %p310, %p311
      %p313 = scmp.ne.s32.totalorder %s299, %s300
      %p314 = scmp.eq.s32.totalorder %s30, 3
      %p315 = por %p313, %p314
      %p317 = scmp.ne.s32.totalorder %s300, %s316
      %p318 = scmp.eq.s32.totalorder %s30, 0
      %p319 = por %p317, %p318
      %s320 = ssub.s32 %s32, %s39
      %p321 = scmp.eq.s32.totalorder %s320, 0
      %s323 = sadd.s32 %s322, 1
      %s324 = scalar_select %p321, %s322, %s323
      %p327 = pneg %p321
      %p328 = scmp.eq.s32.totalorder %s24, 3
      %p329 = por %p327, %p328
      %p330 = scmp.ne.s32.totalorder %s322, %s325
      %p331 = scmp.eq.s32.totalorder %s24, 0
      %p332 = por %p330, %p331
      %p333 = scmp.ne.s32.totalorder %s322, %s325
      %p334 = scmp.eq.s32.totalorder %s29, 3
      %p335 = por %p333, %p334
      %p336 = scmp.ne.s32.totalorder %s325, %s326
      %p337 = scmp.eq.s32.totalorder %s29, 0
      %p338 = por %p336, %p337
      %p339 = scmp.ne.s32.totalorder %s325, %s326
      %p340 = scmp.eq.s32.totalorder %s30, 3
      %p341 = por %p339, %p340
      %p343 = scmp.ne.s32.totalorder %s326, %s342
      %p344 = scmp.eq.s32.totalorder %s30, 0
      %p345 = por %p343, %p344
      %s346 = ssub.s32 %s32, %s39
      %p347 = scmp.eq.s32.totalorder %s346, 0
      %s349 = sadd.s32 %s348, 1
      %s350 = scalar_select %p347, %s348, %s349
      %p353 = pneg %p347
      %p354 = scmp.eq.s32.totalorder %s24, 3
      %p355 = por %p353, %p354
      %p356 = scmp.ne.s32.totalorder %s348, %s351
      %p357 = scmp.eq.s32.totalorder %s24, 0
      %p358 = por %p356, %p357
      %p359 = scmp.ne.s32.totalorder %s348, %s351
      %p360 = scmp.eq.s32.totalorder %s29, 3
      %p361 = por %p359, %p360
      %p362 = scmp.ne.s32.totalorder %s351, %s352
      %p363 = scmp.eq.s32.totalorder %s29, 0
      %p364 = por %p362, %p363
      %p365 = scmp.ne.s32.totalorder %s351, %s352
      %p366 = scmp.eq.s32.totalorder %s30, 3
      %p367 = por %p365, %p366
      %p369 = scmp.ne.s32.totalorder %s352, %s368
      %p370 = scmp.eq.s32.totalorder %s30, 0
      %p371 = por %p369, %p370
      %s372 = ssub.s32 %s32, %s39
      %p373 = scmp.eq.s32.totalorder %s372, 0
      %s375 = sadd.s32 %s374, 1
      %s376 = scalar_select %p373, %s374, %s375
      %p379 = pneg %p373
      %p380 = scmp.eq.s32.totalorder %s24, 3
      %p381 = por %p379, %p380
      %p382 = scmp.ne.s32.totalorder %s374, %s377
      %p383 = scmp.eq.s32.totalorder %s24, 0
      %p384 = por %p382, %p383
      %p385 = scmp.ne.s32.totalorder %s374, %s377
      %p386 = scmp.eq.s32.totalorder %s29, 3
      %p387 = por %p385, %p386
      %p388 = scmp.ne.s32.totalorder %s377, %s378
      %p389 = scmp.eq.s32.totalorder %s29, 0
      %p390 = por %p388, %p389
      %p391 = scmp.ne.s32.totalorder %s377, %s378
      %p392 = scmp.eq.s32.totalorder %s30, 3
      %p393 = por %p391, %p392
      %p395 = scmp.ne.s32.totalorder %s378, %s394
      %p396 = scmp.eq.s32.totalorder %s30, 0
      %p397 = por %p395, %p396
      %s398 = ssub.s32 %s32, %s39
      %p399 = scmp.eq.s32.totalorder %s398, 0
      %s401 = sadd.s32 %s400, 1
      %s402 = scalar_select %p399, %s400, %s401
      %p405 = pneg %p399
      %p406 = scmp.eq.s32.totalorder %s24, 3
      %p407 = por %p405, %p406
      %p408 = scmp.ne.s32.totalorder %s400, %s403
      %p409 = scmp.eq.s32.totalorder %s24, 0
      %p410 = por %p408, %p409
      %p411 = scmp.ne.s32.totalorder %s400, %s403
      %p412 = scmp.eq.s32.totalorder %s29, 3
      %p413 = por %p411, %p412
      %p414 = scmp.ne.s32.totalorder %s403, %s404
      %p415 = scmp.eq.s32.totalorder %s29, 0
      %p416 = por %p414, %p415
      %p417 = scmp.ne.s32.totalorder %s403, %s404
      %p418 = scmp.eq.s32.totalorder %s30, 3
      %p419 = por %p417, %p418
      %p421 = scmp.ne.s32.totalorder %s404, %s420
      %p422 = scmp.eq.s32.totalorder %s30, 0
      %p423 = por %p421, %p422
      %s424 = ssub.s32 %s31, %s43
      %p425 = scmp.eq.s32.totalorder %s424, 0
      %s427 = sadd.s32 %s426, 1
      %s428 = scalar_select %p425, %s426, %s427
      %p431 = pneg %p425
      %p432 = scmp.eq.s32.totalorder %s24, 3
      %p433 = por %p431, %p432
      %p434 = scmp.ne.s32.totalorder %s426, %s429
      %p435 = scmp.eq.s32.totalorder %s24, 0
      %p436 = por %p434, %p435
      %p437 = scmp.ne.s32.totalorder %s426, %s429
      %p438 = scmp.eq.s32.totalorder %s29, 3
      %p439 = por %p437, %p438
      %p440 = scmp.ne.s32.totalorder %s429, %s430
      %p441 = scmp.eq.s32.totalorder %s29, 0
      %p442 = por %p440, %p441
      %p443 = scmp.ne.s32.totalorder %s429, %s430
      %p444 = scmp.eq.s32.totalorder %s30, 3
      %p445 = por %p443, %p444
      %p447 = scmp.ne.s32.totalorder %s430, %s446
      %p448 = scmp.eq.s32.totalorder %s30, 0
      %p449 = por %p447, %p448
      %p450 = scmp.le.s32.totalorder 1, %s24
      %p451 = scmp.lt.s32.totalorder %s24, 5
      %p452 = pnand %p450, %p451
      %p453 = pneg %p452
      // Predicated region
      $region9: #{citl_encoder.1} parent=5 // pred_check
        _
      $region10: #{citl_encoder.1} parent=5 // pred_check_branch
        %455 = sbr.rel (%p452) target = $region12
      $region11: #{citl_encoder.1} parent=5 // pred_region
        %s456 = ssub.s32 %s24, 1
        // Predicated region
        $region13: #{citl_encoder.1} parent=11 // pred_check
          %p457 = pneg %p109
        $region14: #{citl_encoder.1} parent=11 // pred_check_branch
          %459 = sbr.rel (%p457) target = $region16
        $region15: #{citl_encoder.1} parent=11 // pred_region
          _
        $region16: #{citl_encoder.1} parent=11 // pred_fallthru
          _
        // Predicated region
        $region17: #{citl_encoder.1} parent=11 // pred_check
          %p460 = pneg %p130
        $region18: #{citl_encoder.1} parent=11 // pred_check_branch
          %462 = sbr.rel (%p460) target = $region20
        $region19: #{citl_encoder.1} parent=11 // pred_region
          _
        $region20: #{citl_encoder.1} parent=11 // pred_fallthru
          _
      $region12: #{citl_encoder.1} parent=5 // pred_fallthru
        _
      %p463 = scmp.lt.s32.totalorder %s24, 4
      // Predicated region
      $region21: #{citl_encoder.1} parent=5 // pred_check
        %p464 = pneg %p463
      $region22: #{citl_encoder.1} parent=5 // pred_check_branch
        %466 = sbr.rel (%p464) target = $region24
      $region23: #{citl_encoder.1} parent=5 // pred_region
        // Predicated region
        $region25: #{citl_encoder.1} parent=23 // pred_check
          %p467 = pneg %p56
        $region26: #{citl_encoder.1} parent=23 // pred_check_branch
          %469 = sbr.rel (%p467) target = $region28
        $region27: #{citl_encoder.1} parent=23 // pred_region
          %p470 = scmp.lt.s32.totalorder %s31, 1
          %s471 = scalar_select %p470, %s31, 1
          %s472 = smul.addr %s471, 8
          %s473 = scalar_lea.vmem %s0, %s472
        $region28: #{citl_encoder.1} parent=23 // pred_fallthru
          _
        // Predicated region
        $region29: #{citl_encoder.1} parent=23 // pred_check
          %p474 = pneg %p82
        $region30: #{citl_encoder.1} parent=23 // pred_check_branch
          %476 = sbr.rel (%p474) target = $region32
        $region31: #{citl_encoder.1} parent=23 // pred_region
          %p477 = scmp.lt.s32.totalorder %s31, 1
          %s478 = scalar_select %p477, %s31, 1
          %s479 = scalar_lea.vmem %s1, %s478
        $region32: #{citl_encoder.1} parent=23 // pred_fallthru
          _
        // Predicated region
        $region33: #{citl_encoder.1} parent=23 // pred_check
          %p480 = pneg %p150
        $region34: #{citl_encoder.1} parent=23 // pred_check_branch
          %482 = sbr.rel (%p480) target = $region36
        $region35: #{citl_encoder.1} parent=23 // pred_region
          %p483 = scmp.lt.s32.totalorder %s32, 1
          %s484 = scalar_select %p483, %s32, 1
          %s485 = scalar_lea.vmem %s4, %s484
        $region36: #{citl_encoder.1} parent=23 // pred_fallthru
          _
        // Predicated region
        $region37: #{citl_encoder.1} parent=23 // pred_check
          %p486 = pneg %p176
        $region38: #{citl_encoder.1} parent=23 // pred_check_branch
          %488 = sbr.rel (%p486) target = $region40
        $region39: #{citl_encoder.1} parent=23 // pred_region
          %p489 = scmp.lt.s32.totalorder %s32, 1
          %s490 = scalar_select %p489, %s32, 1
          %s491 = smul.addr %s490, 4
          %s492 = smul.addr %s491, 4
          %s493 = scalar_lea.vmem %s5, %s492
        $region40: #{citl_encoder.1} parent=23 // pred_fallthru
          _
        // Predicated region
        $region41: #{citl_encoder.1} parent=23 // pred_check
          %p494 = pneg %p202
        $region42: #{citl_encoder.1} parent=23 // pred_check_branch
          %496 = sbr.rel (%p494) target = $region44
        $region43: #{citl_encoder.1} parent=23 // pred_region
          %p497 = scmp.lt.s32.totalorder %s32, 1
          %s498 = scalar_select %p497, %s32, 1
          %s499 = scalar_lea.vmem %s6, %s498
        $region44: #{citl_encoder.1} parent=23 // pred_fallthru
          _
        // Predicated region
        $region45: #{citl_encoder.1} parent=23 // pred_check
          %p500 = pneg %p228
        $region46: #{citl_encoder.1} parent=23 // pred_check_branch
          %502 = sbr.rel (%p500) target = $region48
        $region47: #{citl_encoder.1} parent=23 // pred_region
          %p503 = scmp.lt.s32.totalorder %s32, 1
          %s504 = scalar_select %p503, %s32, 1
          %s505 = smul.addr %s504, 4
          %s506 = smul.addr %s505, 4
          %s507 = scalar_lea.vmem %s7, %s506
        $region48: #{citl_encoder.1} parent=23 // pred_fallthru
          _
        // Predicated region
        $region49: #{citl_encoder.1} parent=23 // pred_check
          %p508 = pneg %p254
        $region50: #{citl_encoder.1} parent=23 // pred_check_branch
          %510 = sbr.rel (%p508) target = $region52
        $region51: #{citl_encoder.1} parent=23 // pred_region
          %p511 = scmp.lt.s32.totalorder %s32, 1
          %s512 = scalar_select %p511, %s32, 1
          %s513 = scalar_lea.vmem %s8, %s512
        $region52: #{citl_encoder.1} parent=23 // pred_fallthru
          _
        // Predicated region
        $region53: #{citl_encoder.1} parent=23 // pred_check
          %p514 = pneg %p280
        $region54: #{citl_encoder.1} parent=23 // pred_check_branch
          %516 = sbr.rel (%p514) target = $region56
        $region55: #{citl_encoder.1} parent=23 // pred_region
          %p517 = scmp.lt.s32.totalorder %s32, 1
          %s518 = scalar_select %p517, %s32, 1
          %s519 = scalar_lea.vmem %s9, %s518
        $region56: #{citl_encoder.1} parent=23 // pred_fallthru
          _
        // Predicated region
        $region57: #{citl_encoder.1} parent=23 // pred_check
          %p520 = pneg %p306
        $region58: #{citl_encoder.1} parent=23 // pred_check_branch
          %522 = sbr.rel (%p520) target = $region60
        $region59: #{citl_encoder.1} parent=23 // pred_region
          %p523 = scmp.lt.s32.totalorder %s32, 1
          %s524 = scalar_select %p523, %s32, 1
          %s525 = smul.addr %s524, 4
          %s526 = smul.addr %s525, 4
          %s527 = scalar_lea.vmem %s10, %s526
        $region60: #{citl_encoder.1} parent=23 // pred_fallthru
          _
        // Predicated region
        $region61: #{citl_encoder.1} parent=23 // pred_check
          %p528 = pneg %p332
        $region62: #{citl_encoder.1} parent=23 // pred_check_branch
          %530 = sbr.rel (%p528) target = $region64
        $region63: #{citl_encoder.1} parent=23 // pred_region
          %p531 = scmp.lt.s32.totalorder %s32, 1
          %s532 = scalar_select %p531, %s32, 1
          %s533 = scalar_lea.vmem %s11, %s532
        $region64: #{citl_encoder.1} parent=23 // pred_fallthru
          _
        // Predicated region
        $region65: #{citl_encoder.1} parent=23 // pred_check
          %p534 = pneg %p358
        $region66: #{citl_encoder.1} parent=23 // pred_check_branch
          %536 = sbr.rel (%p534) target = $region68
        $region67: #{citl_encoder.1} parent=23 // pred_region
          %p537 = scmp.lt.s32.totalorder %s32, 1
          %s538 = scalar_select %p537, %s32, 1
          %s539 = smul.addr %s538, 16
          %s540 = smul.addr %s539, 4
          %s541 = scalar_lea.vmem %s12, %s540
        $region68: #{citl_encoder.1} parent=23 // pred_fallthru
          _
        // Predicated region
        $region69: #{citl_encoder.1} parent=23 // pred_check
          %p542 = pneg %p384
        $region70: #{citl_encoder.1} parent=23 // pred_check_branch
          %544 = sbr.rel (%p542) target = $region72
        $region71: #{citl_encoder.1} parent=23 // pred_region
          %p545 = scmp.lt.s32.totalorder %s32, 1
          %s546 = scalar_select %p545, %s32, 1
          %s547 = scalar_lea.vmem %s13, %s546
        $region72: #{citl_encoder.1} parent=23 // pred_fallthru
          _
        // Predicated region
        $region73: #{citl_encoder.1} parent=23 // pred_check
          %p548 = pneg %p410
        $region74: #{citl_encoder.1} parent=23 // pred_check_branch
          %550 = sbr.rel (%p548) target = $region76
        $region75: #{citl_encoder.1} parent=23 // pred_region
          %p551 = scmp.lt.s32.totalorder %s32, 1
          %s552 = scalar_select %p551, %s32, 1
          %s553 = smul.addr %s552, 4
          %s554 = smul.addr %s553, 8
          %s555 = scalar_lea.vmem %s14, %s554
        $region76: #{citl_encoder.1} parent=23 // pred_fallthru
          _
      $region24: #{citl_encoder.1} parent=5 // pred_fallthru
        _
      %p556 = scmp.le.s32.totalorder 1, %s24
      %p557 = scmp.lt.s32.totalorder %s24, 5
      %p558 = pnand %p556, %p557
      %p559 = pneg %p558
      // Predicated region
      $region77: #{citl_encoder.1} parent=5 // pred_check
        _
      $region78: #{citl_encoder.1} parent=5 // pred_check_branch
        %561 = sbr.rel (%p558) target = $region80
      $region79: #{citl_encoder.1} parent=5 // pred_region
        %s562 = ssub.s32 %s24, 1
        %p563 = scmp.lt.s32.totalorder %s33, 1
        %s564 = scalar_select %p563, %s33, 1
        %s565 = smul.addr %s564, 8
        %s566 = scalar_lea.vmem %s0, %s565
        %p567 = pneg %p62
        %p568 = pneg %p59
        %p569 = scmp.lt.s32.totalorder %s33, 1
        %s570 = scalar_select %p569, %s33, 1
        %s571 = scalar_lea.vmem %s1, %s570
        %p572 = pneg %p88
        %p573 = pneg %p85
        %p574 = pneg %p109
        %p575 = pneg %p106
        %p576 = pneg %p130
        %p577 = pneg %p127
        %p578 = scmp.lt.s32.totalorder %s34, 1
        %s579 = scalar_select %p578, %s34, 1
        %s580 = scalar_lea.vmem %s4, %s579
        %p581 = pneg %p156
        %p582 = pneg %p153
        %p583 = scmp.lt.s32.totalorder %s34, 1
        %s584 = scalar_select %p583, %s34, 1
        %s585 = smul.addr %s584, 4
        %s586 = smul.addr %s585, 4
        %s587 = scalar_lea.vmem %s5, %s586
        %p588 = pneg %p182
        %p589 = pneg %p179
        %p590 = scmp.lt.s32.totalorder %s34, 1
        %s591 = scalar_select %p590, %s34, 1
        %s592 = scalar_lea.vmem %s6, %s591
        %p593 = pneg %p208
        %p594 = pneg %p205
        %p595 = scmp.lt.s32.totalorder %s34, 1
        %s596 = scalar_select %p595, %s34, 1
        %s597 = smul.addr %s596, 4
        %s598 = smul.addr %s597, 4
        %s599 = scalar_lea.vmem %s7, %s598
        %p600 = pneg %p234
        %p601 = pneg %p231
        %p602 = scmp.lt.s32.totalorder %s34, 1
        %s603 = scalar_select %p602, %s34, 1
        %s604 = scalar_lea.vmem %s8, %s603
        %p605 = pneg %p260
        %p606 = pneg %p257
        %p607 = scmp.lt.s32.totalorder %s34, 1
        %s608 = scalar_select %p607, %s34, 1
        %s609 = scalar_lea.vmem %s9, %s608
        %p610 = pneg %p286
        %p611 = pneg %p283
        %p612 = scmp.lt.s32.totalorder %s34, 1
        %s613 = scalar_select %p612, %s34, 1
        %s614 = smul.addr %s613, 4
        %s615 = smul.addr %s614, 4
        %s616 = scalar_lea.vmem %s10, %s615
        %p617 = pneg %p312
        %p618 = pneg %p309
        %p619 = scmp.lt.s32.totalorder %s34, 1
        %s620 = scalar_select %p619, %s34, 1
        %s621 = scalar_lea.vmem %s11, %s620
        %p622 = pneg %p338
        %p623 = pneg %p335
        %p624 = scmp.lt.s32.totalorder %s34, 1
        %s625 = scalar_select %p624, %s34, 1
        %s626 = smul.addr %s625, 16
        %s627 = smul.addr %s626, 4
        %s628 = scalar_lea.vmem %s12, %s627
        %p629 = pneg %p364
        %p630 = pneg %p361
        %p631 = scmp.lt.s32.totalorder %s34, 1
        %s632 = scalar_select %p631, %s34, 1
        %s633 = scalar_lea.vmem %s13, %s632
        %p634 = pneg %p390
        %p635 = pneg %p387
        %p636 = scmp.lt.s32.totalorder %s34, 1
        %s637 = scalar_select %p636, %s34, 1
        %s638 = smul.addr %s637, 4
        %s639 = smul.addr %s638, 8
        %s640 = scalar_lea.vmem %s14, %s639
        %p641 = pneg %p416
        %p642 = pneg %p413
        %p643 = pneg %p442
        %p644 = pneg %p439
        %s645 = sand.u32 %s429, 1
        %s646 = scalar_lea.sflag [#allocation3], %s645
        %s647 = sand.u32 %s429, 1
        %s648 = smul.addr %s647, 8
        %s649 = scalar_lea.vmem [#allocation2], %s648
        %p650 = scmp.lt.s32.totalorder %s33, 1
        %s651 = scalar_select %p650, %s33, 1
        %s652 = smul.addr %s651, 8
        %s653 = scalar_lea.vmem %s0, %s652
        %p654 = scmp.lt.s32.totalorder %s33, 1
        %s655 = scalar_select %p654, %s33, 1
        %s656 = scalar_lea.vmem %s1, %s655
        %p657 = scmp.lt.s32.totalorder %s34, 1
        %s658 = scalar_select %p657, %s34, 1
        %s659 = scalar_lea.vmem %s4, %s658
        %p660 = scmp.lt.s32.totalorder %s34, 1
        %s661 = scalar_select %p660, %s34, 1
        %s662 = smul.addr %s661, 4
        %s663 = smul.addr %s662, 4
        %s664 = scalar_lea.vmem %s5, %s663
        %p665 = scmp.lt.s32.totalorder %s34, 1
        %s666 = scalar_select %p665, %s34, 1
        %s667 = scalar_lea.vmem %s6, %s666
        %p668 = scmp.lt.s32.totalorder %s34, 1
        %s669 = scalar_select %p668, %s34, 1
        %s670 = smul.addr %s669, 4
        %s671 = smul.addr %s670, 4
        %s672 = scalar_lea.vmem %s7, %s671
        %p673 = scmp.lt.s32.totalorder %s34, 1
        %s674 = scalar_select %p673, %s34, 1
        %s675 = scalar_lea.vmem %s8, %s674
        %p676 = scmp.lt.s32.totalorder %s34, 1
        %s677 = scalar_select %p676, %s34, 1
        %s678 = scalar_lea.vmem %s9, %s677
        %p679 = scmp.lt.s32.totalorder %s34, 1
        %s680 = scalar_select %p679, %s34, 1
        %s681 = smul.addr %s680, 4
        %s682 = smul.addr %s681, 4
        %s683 = scalar_lea.vmem %s10, %s682
        %p684 = scmp.lt.s32.totalorder %s34, 1
        %s685 = scalar_select %p684, %s34, 1
        %s686 = scalar_lea.vmem %s11, %s685
        %p687 = scmp.lt.s32.totalorder %s34, 1
        %s688 = scalar_select %p687, %s34, 1
        %s689 = smul.addr %s688, 16
        %s690 = smul.addr %s689, 4
        %s691 = scalar_lea.vmem %s12, %s690
        %p692 = scmp.lt.s32.totalorder %s34, 1
        %s693 = scalar_select %p692, %s34, 1
        %s694 = scalar_lea.vmem %s13, %s693
        %p695 = scmp.lt.s32.totalorder %s34, 1
        %s696 = scalar_select %p695, %s34, 1
        %s697 = smul.addr %s696, 4
        %s698 = smul.addr %s697, 8
        %s699 = scalar_lea.vmem %s14, %s698
        %p701 = scmp.eq.s32.totalorder %s34, 0
        // Predicated region
        $region81: #{citl_encoder.1} parent=79 // pred_check
          %p702 = pneg %p701
        $region82: #{citl_encoder.1} parent=79 // pred_check_branch
          %704 = sbr.rel (%p702) target = $region84
        $region83: #{citl_encoder.1} parent=79 // pred_region
          %v705 = vld [vmem:[%s653] sm:$0xff]
          %v706 = vpack.c.bf16 %v705, %v705
          %v707 = vld [vmem:[%s2] sm:$0xf]
          %v708 = vld [vmem:[%s2 + $0x4] sm:$0xf]
          %v709 = vld [vmem:[%s3] sm:$0x1]
          %v711 = vperm.slane %v709, 0
          %v715 = vunpack.c.l.b16 %v707
          %v716 = vunpack.c.l.b16 %v708
          %v717 = vpack.c.b16 %v716, %v715
          %vm719 = vcmask 130048
          %v721 = vsel %vm719, %v706, 0
          %723 = vmatpush.bf16.msra.mxu0 0
          %724 = vmatpush.bf16.msra.mxu0 0
          %725 = vmatpush.bf16.msra.mxu0 0
          %726 = vmatpush.bf16.msra.mxu0 0
          %727 = vmatpush.bf16.msra.mxu0 0
          %728 = vmatpush.bf16.msra.mxu0 0
          %729 = vmatpush.bf16.msra.mxu0 0
          %730 = vmatpush.bf16.msra.mxu0 %v717
          %731 = vmatmul.bf16.gmra.mxu0 %v721
          %v732 = vpop.f32.mrf.mxu0
          %v733 = vadd.f32 %v711, %v732
          %v734 = vpop.f32.mrf.mxu0
          %735 = vdwg.mxu0
          %vm736 = vcmask 261120
          %737 = vst.msk [vmem:[%s649] sm:$0xff] %vm736, %v733
        $region84: #{citl_encoder.1} parent=79 // pred_fallthru
          _
        %v738 = vld [vmem:[%s649] sm:$0xff]
        %v739 = vld [vmem:[%s659] sm:$0x1]
        %v740 = vmul.f32 %v738, %v738
        %vm741 = vcmask 261120
        %v742 = vsel %vm741, %v740, 0.0
        %743 = vadd.xlane.f32.xlu0 %v742
        %v744 = vpop.xlane.xlu0 %743
        %v745 = vrcp.pop 32.0
        %v746 = vmul.f32 32.0, %v745
        %v747 = vsub.f32 1.0, %v746
        %v748 = vmul.f32 %v745, %v747
        %v749 = vadd.f32 %v745, %v748
        %vm750 = vweird.f32 %v745
        %v751 = vsel %vm750, %v745, %v749
        %v752 = vmul.f32 %v744, %v751
        %v753 = vadd.f32 %v752, 1e-06
        %v754 = vrsqrt.pop %v753
        %v755 = vmul.f32 %v754, %v753
        %v756 = vmul.f32 %v755, %v754
        %v757 = vmul.f32 0.5, %v756
        %v758 = vsub.f32 1.5, %v757
        %v759 = vmul.f32 %v754, %v758
        %vm760 = vweird.f32 %v753
        %vm761 = vweird.f32 %v754
        %vm762 = vmor %vm760, %vm761
        %v763 = vsel %vm762, %v754, %v759
        %v764 = vmul.f32 %v738, %v763
        %v766 = vperm.slane %v739, 0
        %v768 = vmul.f32 %v764, %v766
        %v769 = vpack.c.bf16 %v768, %v768
        %v770 = vld [vmem:[%s664] sm:$0xf]
        %v771 = vld [vmem:[%s664 + $0x4] sm:$0xf]
        %v772 = vld [vmem:[%s664 + $0x8] sm:$0xf]
        %v773 = vld [vmem:[%s664 + $0xc] sm:$0xf]
        %v774 = vld [vmem:[%s667] sm:$0x1]
        %v776 = vperm.slane %v774, 0
        %v782 = vunpack.c.l.b16 %v770
        %v783 = vunpack.c.l.b16 %v771
        %v784 = vunpack.c.l.b16 %v772
        %v785 = vunpack.c.l.b16 %v773
        %v786 = vpack.c.b16 %v783, %v782
        %v787 = vpack.c.b16 %v785, %v784
        %v791 = vsel %vm741, %v769, 0
        %793 = vmatpush.bf16.msra.mxu0 0
        %794 = vmatpush.bf16.msra.mxu0 0
        %795 = vmatpush.bf16.msra.mxu0 0
        %796 = vmatpush.bf16.msra.mxu0 0
        %797 = vmatpush.bf16.msra.mxu0 0
        %798 = vmatpush.bf16.msra.mxu0 0
        %799 = vmatpush.bf16.msra.mxu0 %v787
        %800 = vmatpush.bf16.msra.mxu0 %v786
        %801 = vmatmul.bf16.gmra.mxu0 %v791
        %v802 = vpop.f32.mrf.mxu0
        %v803 = vadd.f32 %v776, %v802
        %v804 = vpop.f32.mrf.mxu0
        %805 = vdwg.mxu0
        %v806 = vld [vmem:[%s656] sm:$0x1]
        %808 = vrot.lane.b32.xlu0 %v803, 96
        %v809 = vpop.permute.xlu0 %808
        %vm810 = vcmask 64512
        %v811 = vsel %vm810, %v803, 0
        %v813 = vsel %vm810, %v809, 0
        %815 = vmatpush.xpose.msra.mxu0 0.0
        %816 = vmatpush.xpose.msra.mxu0 0.0
        %817 = vmatpush.xpose.msra.mxu0 0.0
        %818 = vmatpush.xpose.msra.mxu0 0.0
        %819 = vmatpush.xpose.msra.mxu0 0.0
        %820 = vmatpush.xpose.msra.mxu0 0.0
        %821 = vmatpush.xpose.msra.mxu0 0.0
        %822 = vmatpush.xpose.msra.mxu0 0.0
        %823 = vmatpush.xpose.msra.mxu0 0.0
        %824 = vmatpush.xpose.msra.mxu0 0.0
        %825 = vmatpush.xpose.msra.mxu0 0.0
        %826 = vmatpush.xpose.msra.mxu0 0.0
        %827 = vmatpush.xpose.msra.mxu0 0.0
        %828 = vmatpush.xpose.msra.mxu0 0.0
        %829 = vmatpush.xpose.msra.mxu0 0.0
        %830 = vmatpush.xpose.msra.mxu0 %v813
        %831 = vmatmul.f32.gmra.mxu0 %v811
        %v832 = vpop.f32.mrf.mxu0
        %v833 = vadd.f32 0.0, %v832
        %834 = vdwg.mxu0
        %v835 = vmul.f32 %v833, 0.35355338
        %v836 = vld [vmem:[%s699] sm:$0xff]
        %v837 = vadd.f32 %v835, %v836
        %v839 = vperm.slane %v806, 0
        %v841 = vadd.f32 %v837, %v839
        %v842 = vsel %vm810, %v841, -inf
        %843 = vmax.xlane.f32.xlu0 %v842
        %v844 = vpop.xlane.xlu0 %843
        %v845 = vsub.f32 %v841, %v844
        %v846 = vmul.f32 %v845, 1.442695
        %v847 = vpow.pop %v846
        %v848 = vsel %vm810, %v847, 0.0
        %849 = vadd.xlane.f32.xlu0 %v848
        %v850 = vpop.xlane.xlu0 %849
        %v851 = vrcp.pop %v850
        %v852 = vmul.f32 %v847, %v851
        %v853 = vpack.c.bf16 %v852, %v852
        %v854 = vpack.c.bf16 %v803, %v803
        %856 = vrot.lane.b32.xlu0 %v854, 64
        %v857 = vpop.permute.xlu0 %856
        %v859 = vsel %vm810, %v853, 0
        %vm861 = vcmask 1043456
        %v863 = vsel %vm861, %v857, 0
        %865 = vmatpush.bf16.msra.mxu0 0
        %866 = vmatpush.bf16.msra.mxu0 0
        %867 = vmatpush.bf16.msra.mxu0 0
        %868 = vmatpush.bf16.msra.mxu0 0
        %869 = vmatpush.bf16.msra.mxu0 0
        %870 = vmatpush.bf16.msra.mxu0 0
        %871 = vmatpush.bf16.msra.mxu0 0
        %872 = vmatpush.bf16.msra.mxu0 %v863
        %873 = vmatmul.bf16.gmra.mxu0 %v859
        %v874 = vpop.f32.mrf.mxu0
        %v875 = vadd.f32 0.0, %v874
        %v876 = vpop.f32.mrf.mxu0
        %877 = vdwg.mxu0
        %878 = vrot.lane.b32.xlu0 %v803, 120
        %v879 = vpop.permute.xlu0 %878
        %880 = vrot.lane.b32.xlu0 %v803, 88
        %v881 = vpop.permute.xlu0 %880
        %v882 = vsel %vm810, %v879, 0
        %v884 = vsel %vm810, %v881, 0
        %886 = vmatpush.xpose.msra.mxu0 0.0
        %887 = vmatpush.xpose.msra.mxu0 0.0
        %888 = vmatpush.xpose.msra.mxu0 0.0
        %889 = vmatpush.xpose.msra.mxu0 0.0
        %890 = vmatpush.xpose.msra.mxu0 0.0
        %891 = vmatpush.xpose.msra.mxu0 0.0
        %892 = vmatpush.xpose.msra.mxu0 0.0
        %893 = vmatpush.xpose.msra.mxu0 0.0
        %894 = vmatpush.xpose.msra.mxu0 0.0
        %895 = vmatpush.xpose.msra.mxu0 0.0
        %896 = vmatpush.xpose.msra.mxu0 0.0
        %897 = vmatpush.xpose.msra.mxu0 0.0
        %898 = vmatpush.xpose.msra.mxu0 0.0
        %899 = vmatpush.xpose.msra.mxu0 0.0
        %900 = vmatpush.xpose.msra.mxu0 0.0
        %901 = vmatpush.xpose.msra.mxu0 %v884
        %902 = vmatmul.f32.gmra.mxu0 %v882
        %v903 = vpop.f32.mrf.mxu0
        %v904 = vadd.f32 0.0, %v903
        %905 = vdwg.mxu0
        %v906 = vmul.f32 %v904, 0.35355338
        %s907 = scalar_lea.vmem %s699, 8
        %v908 = vld [vmem:[%s907] sm:$0xff]
        %v909 = vadd.f32 %v906, %v908
        %v910 = vadd.f32 %v909, %v839
        %v911 = vsel %vm810, %v910, -inf
        %912 = vmax.xlane.f32.xlu0 %v911
        %v913 = vpop.xlane.xlu0 %912
        %v914 = vsub.f32 %v910, %v913
        %v915 = vmul.f32 %v914, 1.442695
        %v916 = vpow.pop %v915
        %v917 = vsel %vm810, %v916, 0.0
        %918 = vadd.xlane.f32.xlu0 %v917
        %v919 = vpop.xlane.xlu0 %918
        %v920 = vrcp.pop %v919
        %v921 = vmul.f32 %v916, %v920
        %v922 = vpack.c.bf16 %v921, %v921
        %923 = vrot.lane.b32.xlu0 %v854, 56
        %v924 = vpop.permute.xlu0 %923
        %v926 = vsel %vm810, %v922, 0
        %v929 = vsel %vm861, %v924, 0
        %931 = vmatpush.bf16.msra.mxu0 0
        %932 = vmatpush.bf16.msra.mxu0 0
        %933 = vmatpush.bf16.msra.mxu0 0
        %934 = vmatpush.bf16.msra.mxu0 0
        %935 = vmatpush.bf16.msra.mxu0 0
        %936 = vmatpush.bf16.msra.mxu0 0
        %937 = vmatpush.bf16.msra.mxu0 0
        %938 = vmatpush.bf16.msra.mxu0 %v929
        %939 = vmatmul.bf16.gmra.mxu0 %v926
        %v940 = vpop.f32.mrf.mxu0
        %v941 = vadd.f32 0.0, %v940
        %v942 = vpop.f32.mrf.mxu0
        %943 = vdwg.mxu0
        %944 = vrot.lane.b32.xlu0 %v803, 112
        %v945 = vpop.permute.xlu0 %944
        %946 = vrot.lane.b32.xlu0 %v803, 80
        %v947 = vpop.permute.xlu0 %946
        %v948 = vsel %vm810, %v945, 0
        %v950 = vsel %vm810, %v947, 0
        %952 = vmatpush.xpose.msra.mxu0 0.0
        %953 = vmatpush.xpose.msra.mxu0 0.0
        %954 = vmatpush.xpose.msra.mxu0 0.0
        %955 = vmatpush.xpose.msra.mxu0 0.0
        %956 = vmatpush.xpose.msra.mxu0 0.0
        %957 = vmatpush.xpose.msra.mxu0 0.0
        %958 = vmatpush.xpose.msra.mxu0 0.0
        %959 = vmatpush.xpose.msra.mxu0 0.0
        %960 = vmatpush.xpose.msra.mxu0 0.0
        %961 = vmatpush.xpose.msra.mxu0 0.0
        %962 = vmatpush.xpose.msra.mxu0 0.0
        %963 = vmatpush.xpose.msra.mxu0 0.0
        %964 = vmatpush.xpose.msra.mxu0 0.0
        %965 = vmatpush.xpose.msra.mxu0 0.0
        %966 = vmatpush.xpose.msra.mxu0 0.0
        %967 = vmatpush.xpose.msra.mxu0 %v950
        %968 = vmatmul.f32.gmra.mxu0 %v948
        %v969 = vpop.f32.mrf.mxu0
        %v970 = vadd.f32 0.0, %v969
        %971 = vdwg.mxu0
        %v972 = vmul.f32 %v970, 0.35355338
        %s973 = scalar_lea.vmem %s699, 16
        %v974 = vld [vmem:[%s973] sm:$0xff]
        %v975 = vadd.f32 %v972, %v974
        %v976 = vadd.f32 %v975, %v839
        %v977 = vsel %vm810, %v976, -inf
        %978 = vmax.xlane.f32.xlu0 %v977
        %v979 = vpop.xlane.xlu0 %978
        %v980 = vsub.f32 %v976, %v979
        %v981 = vmul.f32 %v980, 1.442695
        %v982 = vpow.pop %v981
        %v983 = vsel %vm810, %v982, 0.0
        %984 = vadd.xlane.f32.xlu0 %v983
        %v985 = vpop.xlane.xlu0 %984
        %v986 = vrcp.pop %v985
        %v987 = vmul.f32 %v982, %v986
        %v988 = vpack.c.bf16 %v987, %v987
        %989 = vrot.lane.b32.xlu0 %v854, 48
        %v990 = vpop.permute.xlu0 %989
        %v992 = vsel %vm810, %v988, 0
        %v995 = vsel %vm861, %v990, 0
        %997 = vmatpush.bf16.msra.mxu0 0
        %998 = vmatpush.bf16.msra.mxu0 0
        %999 = vmatpush.bf16.msra.mxu0 0
        %1000 = vmatpush.bf16.msra.mxu0 0
        %1001 = vmatpush.bf16.msra.mxu0 0
        %1002 = vmatpush.bf16.msra.mxu0 0
        %1003 = vmatpush.bf16.msra.mxu0 0
        %1004 = vmatpush.bf16.msra.mxu0 %v995
        %1005 = vmatmul.bf16.gmra.mxu0 %v992
        %v1006 = vpop.f32.mrf.mxu0
        %v1007 = vadd.f32 0.0, %v1006
        %v1008 = vpop.f32.mrf.mxu0
        %1009 = vdwg.mxu0
        %1010 = vrot.lane.b32.xlu0 %v803, 104
        %v1011 = vpop.permute.xlu0 %1010
        %1012 = vrot.lane.b32.xlu0 %v803, 72
        %v1013 = vpop.permute.xlu0 %1012
        %v1014 = vsel %vm810, %v1011, 0
        %v1016 = vsel %vm810, %v1013, 0
        %1018 = vmatpush.xpose.msra.mxu0 0.0
        %1019 = vmatpush.xpose.msra.mxu0 0.0
        %1020 = vmatpush.xpose.msra.mxu0 0.0
        %1021 = vmatpush.xpose.msra.mxu0 0.0
        %1022 = vmatpush.xpose.msra.mxu0 0.0
        %1023 = vmatpush.xpose.msra.mxu0 0.0
        %1024 = vmatpush.xpose.msra.mxu0 0.0
        %1025 = vmatpush.xpose.msra.mxu0 0.0
        %1026 = vmatpush.xpose.msra.mxu0 0.0
        %1027 = vmatpush.xpose.msra.mxu0 0.0
        %1028 = vmatpush.xpose.msra.mxu0 0.0
        %1029 = vmatpush.xpose.msra.mxu0 0.0
        %1030 = vmatpush.xpose.msra.mxu0 0.0
        %1031 = vmatpush.xpose.msra.mxu0 0.0
        %1032 = vmatpush.xpose.msra.mxu0 0.0
        %1033 = vmatpush.xpose.msra.mxu0 %v1016
        %1034 = vmatmul.f32.gmra.mxu0 %v1014
        %v1035 = vpop.f32.mrf.mxu0
        %v1036 = vadd.f32 0.0, %v1035
        %1037 = vdwg.mxu0
        %v1038 = vmul.f32 %v1036, 0.35355338
        %s1039 = scalar_lea.vmem %s699, 24
        %v1040 = vld [vmem:[%s1039] sm:$0xff]
        %v1041 = vadd.f32 %v1038, %v1040
        %v1042 = vadd.f32 %v1041, %v839
        %v1043 = vsel %vm810, %v1042, -inf
        %1044 = vmax.xlane.f32.xlu0 %v1043
        %v1045 = vpop.xlane.xlu0 %1044
        %v1046 = vsub.f32 %v1042, %v1045
        %v1047 = vmul.f32 %v1046, 1.442695
        %v1048 = vpow.pop %v1047
        %v1049 = vsel %vm810, %v1048, 0.0
        %1050 = vadd.xlane.f32.xlu0 %v1049
        %v1051 = vpop.xlane.xlu0 %1050
        %v1052 = vrcp.pop %v1051
        %v1053 = vmul.f32 %v1048, %v1052
        %v1054 = vpack.c.bf16 %v1053, %v1053
        %1055 = vrot.lane.b32.xlu0 %v854, 40
        %v1056 = vpop.permute.xlu0 %1055
        %v1058 = vsel %vm810, %v1054, 0
        %v1061 = vsel %vm861, %v1056, 0
        %1063 = vmatpush.bf16.msra.mxu0 0
        %1064 = vmatpush.bf16.msra.mxu0 0
        %1065 = vmatpush.bf16.msra.mxu0 0
        %1066 = vmatpush.bf16.msra.mxu0 0
        %1067 = vmatpush.bf16.msra.mxu0 0
        %1068 = vmatpush.bf16.msra.mxu0 0
        %1069 = vmatpush.bf16.msra.mxu0 0
        %1070 = vmatpush.bf16.msra.mxu0 %v1061
        %1071 = vmatmul.bf16.gmra.mxu0 %v1058
        %v1072 = vpop.f32.mrf.mxu0
        %v1073 = vadd.f32 0.0, %v1072
        %v1074 = vpop.f32.mrf.mxu0
        %1075 = vdwg.mxu0
        %1077 = vrot.lane.b32.xlu0 %v941, 8
        %v1078 = vpop.permute.xlu0 %1077
        %1081 = vrot.lane.b32.xlu0 %v1007, 16
        %v1082 = vpop.permute.xlu0 %1081
        %1085 = vrot.lane.b32.xlu0 %v1073, 24
        %v1086 = vpop.permute.xlu0 %1085
        %v1088 = vsel %vm810, %v875, %v1078
        %vm1089 = vcmask 130048
        %v1090 = vsel %vm1089, %v1088, %v1082
        %vm1091 = vcmask 195584
        %v1092 = vsel %vm1091, %v1090, %v1086
        %v1093 = vpack.c.bf16 %v1092, %v1092
        %v1094 = vld [vmem:[%s672] sm:$0xf]
        %v1095 = vld [vmem:[%s672 + $0x4] sm:$0xf]
        %v1096 = vld [vmem:[%s672 + $0x8] sm:$0xf]
        %v1097 = vld [vmem:[%s672 + $0xc] sm:$0xf]
        %v1102 = vunpack.c.l.b16 %v1094
        %v1103 = vunpack.c.l.b16 %v1095
        %v1104 = vunpack.c.l.b16 %v1096
        %v1105 = vunpack.c.l.b16 %v1097
        %v1106 = vpack.c.b16 %v1103, %v1102
        %v1107 = vpack.c.b16 %v1105, %v1104
        %v1111 = vsel %vm741, %v1093, 0
        %1113 = vmatpush.bf16.msra.mxu0 0
        %1114 = vmatpush.bf16.msra.mxu0 0
        %1115 = vmatpush.bf16.msra.mxu0 0
        %1116 = vmatpush.bf16.msra.mxu0 0
        %1117 = vmatpush.bf16.msra.mxu0 0
        %1118 = vmatpush.bf16.msra.mxu0 0
        %1119 = vmatpush.bf16.msra.mxu0 %v1107
        %1120 = vmatpush.bf16.msra.mxu0 %v1106
        %1121 = vmatmul.bf16.gmra.mxu0 %v1111
        %v1122 = vpop.f32.mrf.mxu0
        %v1123 = vadd.f32 0.0, %v1122
        %v1124 = vpop.f32.mrf.mxu0
        %1125 = vdwg.mxu0
        %v1126 = vadd.f32 %v738, %v1123
        %v1127 = vld [vmem:[%s675] sm:$0x1]
        %v1129 = vperm.slane %v1127, 0
        %v1131 = vadd.f32 %v1126, %v1129
        %v1132 = vld [vmem:[%s678] sm:$0x1]
        %v1133 = vmul.f32 %v1131, %v1131
        %v1134 = vsel %vm741, %v1133, 0.0
        %1135 = vadd.xlane.f32.xlu0 %v1134
        %v1136 = vpop.xlane.xlu0 %1135
        %v1137 = vmul.f32 %v1136, %v751
        %v1138 = vadd.f32 %v1137, 1e-06
        %v1139 = vrsqrt.pop %v1138
        %v1140 = vmul.f32 %v1139, %v1138
        %v1141 = vmul.f32 %v1140, %v1139
        %v1142 = vmul.f32 0.5, %v1141
        %v1143 = vsub.f32 1.5, %v1142
        %v1144 = vmul.f32 %v1139, %v1143
        %vm1145 = vweird.f32 %v1138
        %vm1146 = vweird.f32 %v1139
        %vm1147 = vmor %vm1145, %vm1146
        %v1148 = vsel %vm1147, %v1139, %v1144
        %v1149 = vmul.f32 %v1131, %v1148
        %v1151 = vperm.slane %v1132, 0
        %v1153 = vmul.f32 %v1149, %v1151
        %v1154 = vpack.c.bf16 %v1153, %v1153
        %v1155 = vld [vmem:[%s683] sm:$0xf]
        %v1156 = vld [vmem:[%s683 + $0x4] sm:$0xf]
        %v1157 = vld [vmem:[%s683 + $0x8] sm:$0xf]
        %v1158 = vld [vmem:[%s683 + $0xc] sm:$0xf]
        %v1159 = vld [vmem:[%s686] sm:$0x1]
        %v1161 = vperm.slane %v1159, 0
        %v1167 = vunpack.c.l.b16 %v1155
        %v1168 = vunpack.c.l.b16 %v1156
        %v1169 = vunpack.c.l.b16 %v1157
        %v1170 = vunpack.c.l.b16 %v1158
        %v1171 = vpack.c.b16 %v1168, %v1167
        %v1172 = vpack.c.b16 %v1170, %v1169
        %v1176 = vsel %vm741, %v1154, 0
        %1178 = vmatpush.bf16.msra.mxu0 0
        %1179 = vmatpush.bf16.msra.mxu0 0
        %1180 = vmatpush.bf16.msra.mxu0 0
        %1181 = vmatpush.bf16.msra.mxu0 0
        %1182 = vmatpush.bf16.msra.mxu0 0
        %1183 = vmatpush.bf16.msra.mxu0 0
        %1184 = vmatpush.bf16.msra.mxu0 %v1172
        %1185 = vmatpush.bf16.msra.mxu0 %v1171
        %1186 = vmatmul.bf16.gmra.mxu0 %v1176
        %v1187 = vpop.f32.mrf.mxu0
        %v1188 = vadd.f32 %v1161, %v1187
        %v1189 = vpop.f32.mrf.mxu0
        %1190 = vdwg.mxu0
        %v1191 = vmul.f32 %v1188, 0.5
        %v1192 = vmul.f32 %v1188, 0.044715
        %v1193 = vmul.f32 %v1192, %v1188
        %v1194 = vmul.f32 %v1193, %v1188
        %v1195 = vadd.f32 %v1188, %v1194
        %v1196 = vmul.f32 %v1195, 0.7978846
        %v1197 = vtanh.pop %v1196
        %v1198 = vadd.f32 %v1197, 1.0
        %v1199 = vmul.f32 %v1191, %v1198
        %v1200 = vpack.c.bf16 %v1199, %v1199
        %v1201 = vld [vmem:[%s691] sm:$0xf]
        %v1202 = vld [vmem:[%s691 + $0x4] sm:$0xf]
        %v1203 = vld [vmem:[%s691 + $0x8] sm:$0xf]
        %v1204 = vld [vmem:[%s691 + $0xc] sm:$0xf]
        %v1205 = vld [vmem:[%s691 + $0x10] sm:$0xf]
        %v1206 = vld [vmem:[%s691 + $0x14] sm:$0xf]
        %v1207 = vld [vmem:[%s691 + $0x18] sm:$0xf]
        %v1208 = vld [vmem:[%s691 + $0x1c] sm:$0xf]
        %v1209 = vld [vmem:[%s691 + $0x20] sm:$0xf]
        %v1210 = vld [vmem:[%s691 + $0x24] sm:$0xf]
        %v1211 = vld [vmem:[%s691 + $0x28] sm:$0xf]
        %v1212 = vld [vmem:[%s691 + $0x2c] sm:$0xf]
        %v1213 = vld [vmem:[%s691 + $0x30] sm:$0xf]
        %v1214 = vld [vmem:[%s691 + $0x34] sm:$0xf]
        %v1215 = vld [vmem:[%s691 + $0x38] sm:$0xf]
        %v1216 = vld [vmem:[%s691 + $0x3c] sm:$0xf]
        %v1217 = vld [vmem:[%s694] sm:$0x1]
        %v1219 = vperm.slane %v1217, 0
        %v1237 = vunpack.c.l.b16 %v1201
        %v1238 = vunpack.c.l.b16 %v1202
        %v1239 = vunpack.c.l.b16 %v1203
        %v1240 = vunpack.c.l.b16 %v1204
        %v1241 = vunpack.c.l.b16 %v1205
        %v1242 = vunpack.c.l.b16 %v1206
        %v1243 = vunpack.c.l.b16 %v1207
        %v1244 = vunpack.c.l.b16 %v1208
        %v1245 = vunpack.c.l.b16 %v1209
        %v1246 = vunpack.c.l.b16 %v1210
        %v1247 = vunpack.c.l.b16 %v1211
        %v1248 = vunpack.c.l.b16 %v1212
        %v1249 = vunpack.c.l.b16 %v1213
        %v1250 = vunpack.c.l.b16 %v1214
        %v1251 = vunpack.c.l.b16 %v1215
        %v1252 = vunpack.c.l.b16 %v1216
        %v1253 = vpack.c.b16 %v1238, %v1237
        %v1254 = vpack.c.b16 %v1240, %v1239
        %v1255 = vpack.c.b16 %v1242, %v1241
        %v1256 = vpack.c.b16 %v1244, %v1243
        %v1257 = vpack.c.b16 %v1246, %v1245
        %v1258 = vpack.c.b16 %v1248, %v1247
        %v1259 = vpack.c.b16 %v1250, %v1249
        %v1260 = vpack.c.b16 %v1252, %v1251
        %1269 = vmatpush.bf16.msra.mxu0 %v1260
        %1270 = vmatpush.bf16.msra.mxu0 %v1259
        %1271 = vmatpush.bf16.msra.mxu0 %v1258
        %1272 = vmatpush.bf16.msra.mxu0 %v1257
        %1273 = vmatpush.bf16.msra.mxu0 %v1256
        %1274 = vmatpush.bf16.msra.mxu0 %v1255
        %1275 = vmatpush.bf16.msra.mxu0 %v1254
        %1276 = vmatpush.bf16.msra.mxu0 %v1253
        %1277 = vmatmul.bf16.gmra.mxu0 %v1200
        %v1278 = vpop.f32.mrf.mxu0
        %v1279 = vadd.f32 %v1219, %v1278
        %v1280 = vpop.f32.mrf.mxu0
        %1281 = vdwg.mxu0
        %v1282 = vadd.f32 %v1131, %v1279
        %1283 = vst.msk [vmem:[%s649] sm:$0xff] %vm741, %v1282
        %s1284 = sand.u32 %s429, 1
        %s1285 = scalar_lea.sflag [#allocation3], %s1284
        %s1286 = sand.u32 %s429, 1
        %s1287 = smul.addr %s1286, 8
        %s1288 = scalar_lea.vmem [#allocation2], %s1287
        // Predicated region
        $region85: #{citl_encoder.1} parent=79 // pred_check
          %p1289 = pneg %p439
        $region86: #{citl_encoder.1} parent=79 // pred_check_branch
          %1291 = sbr.rel (%p1289) target = $region88
        $region87: #{citl_encoder.1} parent=79 // pred_region
          %1293 = vsyncadd %s1285, 0
          %s1294 = smul.addr %s33, 8
          %s1295 = scalar_lea.hbm %s15, %s1294
          %s1297 = sshll.u32 %s1288, 4
          %s1298 = int_to_ptr.vmem [resolvable:$true] %s1297
          %s1299 = sshll.u32 %s1295, 4
          %s1300 = int_to_ptr.hbm [resolvable:$true] %s1299
          %1302 = dma.vmem_to_hbm [thread:$0]  %s1298, 128, %s1300, %s1285
        $region88: #{citl_encoder.1} parent=79 // pred_fallthru
          _
      $region80: #{citl_encoder.1} parent=5 // pred_fallthru
        _
      %p1303 = scmp.le.s32.totalorder 2, %s24
      // Predicated region
      $region89: #{citl_encoder.1} parent=5 // pred_check
        %p1304 = pneg %p1303
      $region90: #{citl_encoder.1} parent=5 // pred_check_branch
        %1306 = sbr.rel (%p1304) target = $region92
      $region91: #{citl_encoder.1} parent=5 // pred_region
        %s1307 = ssub.s32 %s24, 2
        // Predicated region
        $region93: #{citl_encoder.1} parent=91 // pred_check
          %p1308 = pneg %p445
        $region94: #{citl_encoder.1} parent=91 // pred_check_branch
          %1310 = sbr.rel (%p1308) target = $region96
        $region95: #{citl_encoder.1} parent=91 // pred_region
          %s1311 = sand.u32 %s430, 1
          %s1312 = scalar_lea.sflag [#allocation3], %s1311
          %s1313 = sand.u32 %s430, 1
          %s1314 = smul.addr %s1313, 8
          %s1315 = scalar_lea.vmem [#allocation2], %s1314
          %1317 = dma.done %s1312, 128
        $region96: #{citl_encoder.1} parent=91 // pred_fallthru
          _
      $region92: #{citl_encoder.1} parent=5 // pred_fallthru
        _
    $region6: #{citl_encoder.1} parent=1 // loop_footer
      %s28 = sadd.s32 1, %s24
    $region7: #{citl_encoder.1} parent=1 // loop_footer_branch
      %23 = sbr.rel target = $region3
    $region8: #{citl_encoder.1} parent=1 // loop_exit
      _
    %1318 = vsyncpa [#allocation3], 1
    %s1319 = scalar_lea.sflag [#allocation3], 1
    %1320 = vsyncpa %s1319, 1

</llo_original>
